<compile_context>
chip_gen: v6e
topology: v6e:2x2x1
jax: 0.10.0
libtpu: 0.0.40
codegen_flags: <defaults>
</compile_context>

<pallas_src>
import functools

import jax
import jax.numpy as jnp
import numpy as np
from jax.experimental import pallas as pl
from jax.experimental.pallas import tpu as pltpu

BN_EPS = 1e-5      # torch.nn.BatchNorm1d default eps
L1_EPS = 1e-12     # F.normalize default eps
NEG_HUGE = -1e30   # finite "-inf" for padded entity columns (keeps exp/log NaN-free)
NUM_CORES = 2      # entity axis split over 2 TensorCores (v7x); serial halves on 1-TC chips


# ---------------------------------------------------------------------------
# Kernel 1: question / head side.  Produces a = [re_score | im_score] so that
#     scores = a @ T      (T = pre-folded bf16 tail table, streamed in kernel 2)
# ---------------------------------------------------------------------------
def head_side_kernel(q_ref, w_h2r_ref, b_h2r_ref,
                     ent_ref, w_ph_ref, b_ph_ref,
                     he_ref, w_pt_ref, b_pt_ref,
                     bn_ref, mask_ref,
                     a_ref, *, d, inv_count):
    mask = mask_ref[...]                                        # (B_pad, 1)

    # rel = hidden2rel(q);  head = project_head(E[p_head]) + project_type(he)
    rel = jnp.dot(q_ref[...], w_h2r_ref[...],
                  preferred_element_type=jnp.float32) + b_h2r_ref[...]
    head = (jnp.dot(ent_ref[...], w_ph_ref[...],
                    preferred_element_type=jnp.float32) + b_ph_ref[...]
            + jnp.dot(he_ref[...], w_pt_ref[...],
                      preferred_element_type=jnp.float32) + b_pt_ref[...])

    # BatchNorm1d(2) (training mode, biased variance) with stats over the real
    # batch rows only (mask excludes sublane padding).  bn_ref (SMEM, 8):
    #   [g0_re, g0_im, b0_re, b0_im, g2_re, g2_im, b2_re, b2_im]
    def bn(x, gamma, beta):
        mean = jnp.sum(x * mask) * inv_count
        var = jnp.sum(((x - mean) * mask) ** 2) * inv_count
        return (x - mean) * jax.lax.rsqrt(var + BN_EPS) * gamma + beta

    re_head = bn(head[:, :d], bn_ref[0], bn_ref[2])
    im_head = bn(head[:, d:], bn_ref[1], bn_ref[3])

    re_rel = rel[:, :d]
    im_rel = rel[:, d:]
    re_score = re_head * re_rel - im_head * im_rel
    im_score = re_head * im_rel + im_head * re_rel

    # Direct slice-stores (no jnp.concatenate -> no extra relayout copy).
    a_ref[:, :d] = bn(re_score, bn_ref[4], bn_ref[6]) * mask
    a_ref[:, d:] = bn(im_score, bn_ref[5], bn_ref[7]) * mask


# ---------------------------------------------------------------------------
# Kernel 2: streamed score tiles + online-KL partials over the entity axis.
# Grid = (NUM_CORES [parallel], tiles_per_core [arbitrary]).
# ---------------------------------------------------------------------------
def score_loss_kernel(a_ref, invd_ref, tbl_ref, pt_ref, cmask_ref, *refs,
                      write_scores):
    if write_scores:
        scores_ref, part_ref, scr = refs
    else:
        part_ref, scr = refs

    n = pl.program_id(1)

    # single merged (B_pad, 4) scratch: columns = [m, l, acc, tsum]
    @pl.when(n == 0)
    def _init():
        lane = jax.lax.broadcasted_iota(jnp.int32, scr.shape, 1)
        scr[...] = jnp.where(lane == 0, NEG_HUGE, 0.0)

    # One lane-dense bf16 matmul per tile against the pre-folded tail table.
    a = a_ref[...].astype(jnp.bfloat16)
    s = jnp.dot(a, tbl_ref[...], preferred_element_type=jnp.float32)
    if write_scores:
        scores_ref[...] = s

    s_lse = s + cmask_ref[...]                 # NEG_HUGE on padded entity columns
    tgt = pt_ref[...] * invd_ref[...]          # L1-normalized targets

    m_prev = scr[:, 0:1]
    l_prev = scr[:, 1:2]
    acc_prev = scr[:, 2:3]
    ts_prev = scr[:, 3:4]

    # Online logsumexp over this core's entity tiles.
    m_new = jnp.maximum(m_prev, jnp.max(s_lse, axis=1, keepdims=True))
    l_new = (l_prev * jnp.exp(m_prev - m_new)
             + jnp.sum(jnp.exp(s_lse - m_new), axis=1, keepdims=True))
    # KLDiv(sum) pieces:  loss_row = Σ t·(log t - s)  +  (Σ t)·lse
    acc_new = acc_prev + jnp.sum(
        jnp.where(tgt > 0, tgt * (jnp.log(tgt) - s), 0.0), axis=1, keepdims=True)
    ts_new = ts_prev + jnp.sum(tgt, axis=1, keepdims=True)

    new_state = jnp.concatenate([m_new, l_new, acc_new, ts_new], axis=1)
    scr[...] = new_state

    @pl.when(n == pl.num_programs(1) - 1)
    def _finalize():
        part_ref[0] = new_state                # per-core partials -> epilogue


# ---------------------------------------------------------------------------
# Wrapper (plain-JAX glue: lookups, padding, tile sizing, cross-core combine)
# ---------------------------------------------------------------------------
def _round_up(x, m):
    return ((x + m - 1) // m) * m


def _vmem_limit_bytes():
    try:
        cap = int(pltpu.get_tpu_info().vmem_capacity_bytes)
    except Exception:
        cap = 64 * 1024 * 1024
    if cap < 16 * 1024 * 1024:
        cap = 64 * 1024 * 1024
    # ~75% of physical: ~96 MiB on v5e/v6e (128 MiB VMEM), ~48 MiB on v7x (64 MiB)
    return min(cap * 3 // 4, 100 * 1024 * 1024)


def relation_extractor_forward(params, question_embedding, p_head_idx,
                               p_tail, head_embedding, *, tile_n=4096,
                               return_scores=True):
    tail_tbl = params["tail_table_t"]            # (2D, N) bf16, pre-folded offline
    two_d, n_ent = tail_tbl.shape
    d = two_d // 2
    b = question_embedding.shape[0]
    b_pad = _round_up(max(b, 8), 8)

    def pad_rows(x):
        return jnp.pad(x, ((0, b_pad - x.shape[0]), (0, 0)))

    # ---- head side inputs (row-major gather: contiguous HBM rows) ---------
    ent_emb = jnp.take(params["embedding"], p_head_idx, axis=0)     # (B, 2D)
    q_p = pad_rows(question_embedding.astype(jnp.float32))
    ent_p = pad_rows(ent_emb.astype(jnp.float32))
    he_p = pad_rows(head_embedding.astype(jnp.float32))
    row_mask = (jnp.arange(b_pad) < b).astype(jnp.float32)[:, None]   # (B_pad,1)

    bn_scalars = jnp.concatenate(
        [params["bn0_gamma"], params["bn0_beta"],
         params["bn2_gamma"], params["bn2_beta"]]).astype(jnp.float32)  # (8,)

    vmem = pl.BlockSpec(memory_space=pltpu.MemorySpace.VMEM)
    smem = pl.BlockSpec(memory_space=pltpu.MemorySpace.SMEM)

    # ------------------- kernel 1: head / relation side --------------------
    a = pl.pallas_call(
        functools.partial(head_side_kernel, d=d, inv_count=1.0 / (b * d)),
        out_shape=jax.ShapeDtypeStruct((b_pad, two_d), jnp.float32),
        in_specs=[vmem] * 9 + [smem, vmem],
        out_specs=vmem,
    )(q_p, params["w_h2r_t"], params["b_h2r"],
      ent_p, params["w_ph_t"], params["b_ph"],
      he_p, params["w_pt_t"], params["b_pt"],
      bn_scalars, row_mask)

    # ------------- tile sizing: VMEM budget + small-N cap ------------------
    vmem_limit = int(_vmem_limit_bytes())
    bytes_per_col = (two_d * 2 + b_pad * 4 + 4          # bf16 table + p_tail + mask
                     + (b_pad * 4 if return_scores else 0))
    vmem_tile_cap = max(128, (vmem_limit // 2) // (2 * bytes_per_col) // 128 * 128)
    small_n_cap = max(128, _round_up(pl.cdiv(n_ent, NUM_CORES), 128))
    tile_n = max(128, min(max(128, int(tile_n) // 128 * 128),
                          vmem_tile_cap, small_n_cap))

    num_tiles = pl.cdiv(n_ent, tile_n)
    tiles_per_core = pl.cdiv(num_tiles, NUM_CORES)
    n_pad = NUM_CORES * tiles_per_core * tile_n

    # NOTE: in a real deployment the frozen folded table (and the column mask)
    # would be stored already padded to a tile multiple; the pads here just
    # keep the demo self-contained.
    tbl_p = jnp.pad(tail_tbl, ((0, 0), (0, n_pad - n_ent)))
    p_tail_f = p_tail.astype(jnp.float32)
    p_tail_p = jnp.pad(pad_rows(p_tail_f), ((0, 0), (0, n_pad - n_ent)))
    col_mask = jnp.where(jnp.arange(n_pad) < n_ent, 0.0,
                         NEG_HUGE).astype(jnp.float32)[None, :]       # (1, n_pad)
    inv_den = 1.0 / jnp.maximum(
        jnp.sum(jnp.abs(p_tail_f), axis=1, keepdims=True), L1_EPS)
    inv_den = pad_rows(inv_den)                                       # (B_pad, 1)

    rep = lambda c, n: (0, 0)                        # resident across the grid
    col = lambda c, n: (0, c * tiles_per_core + n)   # streamed entity tiles

    in_specs = [pl.BlockSpec((b_pad, two_d), rep),
                pl.BlockSpec((b_pad, 1), rep),
                pl.BlockSpec((two_d, tile_n), col),
                pl.BlockSpec((b_pad, tile_n), col),
                pl.BlockSpec((1, tile_n), col)]

    out_shapes = []
    out_specs = []
    if return_scores:
        out_shapes.append(jax.ShapeDtypeStruct((b_pad, n_pad), jnp.float32))
        out_specs.append(pl.BlockSpec((b_pad, tile_n), col))
    out_shapes.append(jax.ShapeDtypeStruct((NUM_CORES, b_pad, 4), jnp.float32))
    out_specs.append(pl.BlockSpec((1, b_pad, 4), lambda c, n: (c, 0, 0)))

    outs = pl.pallas_call(
        functools.partial(score_loss_kernel, write_scores=return_scores),
        grid=(NUM_CORES, tiles_per_core),
        out_shape=tuple(out_shapes),
        in_specs=in_specs,
        out_specs=tuple(out_specs),
        scratch_shapes=[pltpu.VMEM((b_pad, 4), jnp.float32)],
        compiler_params=pltpu.CompilerParams(
            dimension_semantics=("parallel", "arbitrary"),
            vmem_limit_bytes=vmem_limit),
    )(a, inv_den, tbl_p, p_tail_p, col_mask)

    if return_scores:
        scores_p, partials = outs
    else:
        partials = outs[0] if isinstance(outs, (tuple, list)) else outs

    # ---- tiny cross-core epilogue: combine per-core (m, l, acc, tsum) -----
    m_c, l_c = partials[:, :, 0], partials[:, :, 1]
    acc_c, ts_c = partials[:, :, 2], partials[:, :, 3]
    m_tot = jnp.max(m_c, axis=0)                                      # (B_pad,)
    l_tot = jnp.sum(l_c * jnp.exp(m_c - m_tot[None, :]), axis=0)
    lse = m_tot + jnp.log(l_tot)
    loss = jnp.sum(jnp.sum(acc_c, axis=0) + jnp.sum(ts_c, axis=0) * lse)

    if return_scores:
        return scores_p[:b, :n_ent], loss
    return loss


# ---------------------------------------------------------------------------
# Deterministic parameter construction + one-time offline table fold.
# ---------------------------------------------------------------------------
def build_params(key, hidden_dim, d, n_ent, n_types):
    two_d = 2 * d
    ks = jax.random.split(key, 12)

    def lin(k, out_dim, in_dim):               # torch orientation (out, in)
        kw, kb = jax.random.split(k)
        w = 0.1 * jax.random.normal(kw, (out_dim, in_dim), jnp.float32)
        b = 0.1 * jax.random.normal(kb, (out_dim,), jnp.float32)
        return w, b

    w_h2r, b_h2r = lin(ks[0], two_d, hidden_dim)   # hidden2rel
    w_ph, b_ph = lin(ks[1], two_d, two_d)          # project_head
    w_pt, b_pt = lin(ks[2], two_d, two_d)          # project_type
    wt1, bt1 = lin(ks[3], d, d)                    # project_tail_1
    wt2, bt2 = lin(ks[4], d, d)                    # project_tail_2
    wtt1, btt1 = lin(ks[5], d, d)                  # project_tail_type_1
    wtt2, btt2 = lin(ks[6], d, d)                  # project_tail_type_2

    embedding = 0.5 * jax.random.normal(ks[7], (n_ent, two_d), jnp.float32)
    type_embedding = 0.5 * jax.random.normal(ks[8], (n_types, two_d), jnp.float32)
    # tail_type_embedding: sum of the type embeddings of each entity's types
    ta = jax.random.randint(ks[9], (n_ent,), 0, n_types)
    tb = jax.random.randint(ks[10], (n_ent,), 0, n_types)
    tail_type_embedding = type_embedding[ta] + type_embedding[tb]

    # One-time offline fold of the (frozen tables x tail-projection Linears),
    # stored transposed (2D, N) and in bf16 so kernel 2 streams ONE table.
    re_tail = (embedding[:, :d] @ wt1.T + bt1
               + tail_type_embedding[:, :d] @ wtt1.T + btt1)
    im_tail = (embedding[:, d:] @ wt2.T + bt2
               + tail_type_embedding[:, d:] @ wtt2.T + btt2)
    tail_table_t = jnp.concatenate([re_tail, im_tail], axis=1).T.astype(jnp.bfloat16)

    return dict(
        w_h2r_t=w_h2r.T, b_h2r=b_h2r[None, :],
        w_ph_t=w_ph.T, b_ph=b_ph[None, :],
        w_pt_t=w_pt.T, b_pt=b_pt[None, :],
        embedding=embedding,                        # (N, 2D) row-major head lookup
        tail_table_t=tail_table_t,                  # (2D, N) bf16 streamed table
        # raw pieces kept only for the plain-JAX reference check:
        wt1=wt1, bt1=bt1, wt2=wt2, bt2=bt2,
        wtt1=wtt1, btt1=btt1, wtt2=wtt2, btt2=btt2,
        tail_type_embedding=tail_type_embedding,
        # BatchNorm1d(2) affine params at default init (weight=1, bias=0)
        bn0_gamma=jnp.ones((2,), jnp.float32), bn0_beta=jnp.zeros((2,), jnp.float32),
        bn2_gamma=jnp.ones((2,), jnp.float32), bn2_beta=jnp.zeros((2,), jnp.float32),
    )


# ---------------------------------------------------------------------------
# Plain-JAX reference (un-folded, un-tiled, f32) for a sanity check.
# ---------------------------------------------------------------------------
def reference_forward(params, q, p_head_idx, p_tail, head_embedding):
    d = params["wt1"].shape[0]
    e = params["embedding"]
    tt = params["tail_type_embedding"]

    rel = q @ params["w_h2r_t"] + params["b_h2r"]
    head = (e[p_head_idx] @ params["w_ph_t"] + params["b_ph"]
            + head_embedding @ params["w_pt_t"] + params["b_pt"])

    def bn(x, g, b_):
        m = jnp.mean(x)
        v = jnp.mean((x - m) ** 2)
        return (x - m) * jax.lax.rsqrt(v + BN_EPS) * g + b_

    re_h = bn(head[:, :d], params["bn0_gamma"][0], params["bn0_beta"][0])
    im_h = bn(head[:, d:], params["bn0_gamma"][1], params["bn0_beta"][1])
    re_r, im_r = rel[:, :d], rel[:, d:]
    re_s = bn(re_h * re_r - im_h * im_r, params["bn2_gamma"][0], params["bn2_beta"][0])
    im_s = bn(re_h * im_r + im_h * re_r, params["bn2_gamma"][1], params["bn2_beta"][1])

    re_tail = e[:, :d] @ params["wt1"].T + params["bt1"] \
        + tt[:, :d] @ params["wtt1"].T + params["btt1"]
    im_tail = e[:, d:] @ params["wt2"].T + params["bt2"] \
        + tt[:, d:] @ params["wtt2"].T + params["btt2"]
    scores = re_s @ re_tail.T + im_s @ im_tail.T

    logp = jax.nn.log_softmax(scores, axis=1)
    tgt = p_tail / jnp.maximum(jnp.sum(jnp.abs(p_tail), axis=1, keepdims=True), L1_EPS)
    kl = jnp.where(tgt > 0, tgt * (jnp.log(tgt) - logp), 0.0)
    return scores, jnp.sum(kl)


if __name__ == "__main__":
    B = 2
    H = 32          # stand-in for the 768-dim BERT hidden size
    REL_DIM = 16    # relation_dim; multiplier=2 -> full ComplEx dim 2D = 32
    D = REL_DIM
    N_ENT = 600     # deliberately NOT a multiple of the 128-entity tile
    N_TYPES = 8

    root = jax.random.PRNGKey(0)
    k_par, k_q, k_head, k_he, k_tail = jax.random.split(root, 5)

    params = build_params(k_par, H, D, N_ENT, N_TYPES)

    question_embedding = jax.random.normal(k_q, (B, H), jnp.float32)   # CLS emb
    p_head = jax.random.randint(k_head, (B,), 0, N_ENT)                # head ids
    head_embedding = jax.random.normal(k_he, (B, 2 * D), jnp.float32)  # head type emb
    tail_idx = jax.random.randint(k_tail, (B,), 0, N_ENT)
    p_tail = jax.nn.one_hot(tail_idx, N_ENT, dtype=jnp.float32)        # one-hot target

    fwd = jax.jit(relation_extractor_forward,
                  static_argnames=("tile_n", "return_scores"))

    scores, loss = fwd(params, question_embedding, p_head, p_tail, head_embedding)
    jax.block_until_ready((scores, loss))
    assert scores.shape == (B, N_ENT)
    assert bool(jnp.isfinite(loss))

    # Sanity-check against a plain-JAX reference of the same forward pass.
    ref_scores, ref_loss = reference_forward(
        params, question_embedding, p_head, p_tail, head_embedding)
    np.testing.assert_allclose(np.asarray(scores), np.asarray(ref_scores),
                               rtol=2e-2, atol=5e-2)
    np.testing.assert_allclose(float(loss), float(ref_loss), rtol=2e-2, atol=5e-2)

    # Loss-only path (no dense score writeback).  The small tile here is only
    # to exercise the multi-tile carry and the all-padded final tile at this
    # toy N; the production default stays large (>=1024).
    loss_only = fwd(params, question_embedding, p_head, p_tail, head_embedding,
                    tile_n=256, return_scores=False)
    jax.block_until_ready(loss_only)
    np.testing.assert_allclose(float(loss_only), float(ref_loss),
                               rtol=2e-2, atol=5e-2)

    print("KERNEL_OK")
</pallas_src>

<mosaic_0001>
module attributes {stable_mosaic.version = 11 : i64} {
  func.func @head_side_kernel(%arg0: memref<8x32xf32, #tpu.memory_space<vmem>>, %arg1: memref<32x32xf32, #tpu.memory_space<vmem>>, %arg2: memref<1x32xf32, #tpu.memory_space<vmem>>, %arg3: memref<8x32xf32, #tpu.memory_space<vmem>>, %arg4: memref<32x32xf32, #tpu.memory_space<vmem>>, %arg5: memref<1x32xf32, #tpu.memory_space<vmem>>, %arg6: memref<8x32xf32, #tpu.memory_space<vmem>>, %arg7: memref<32x32xf32, #tpu.memory_space<vmem>>, %arg8: memref<1x32xf32, #tpu.memory_space<vmem>>, %arg9: memref<8xf32, #tpu.memory_space<smem>>, %arg10: memref<8x1xf32, #tpu.memory_space<vmem>>, %arg11: memref<8x32xf32, #tpu.memory_space<vmem>>) attributes {dimension_semantics = [], scalar_prefetch = 0 : i64, scratch_operands = 0 : i64, tpu.core_type = #tpu.core_type<tc>} {
    %c0 = arith.constant 0 : index
    %c0_0 = arith.constant 0 : index
    %0 = vector.load %arg10[%c0, %c0_0] : memref<8x1xf32, #tpu.memory_space<vmem>>, vector<8x1xf32>
    %c0_1 = arith.constant 0 : index
    %c0_2 = arith.constant 0 : index
    %1 = vector.load %arg0[%c0_1, %c0_2] : memref<8x32xf32, #tpu.memory_space<vmem>>, vector<8x32xf32>
    %c0_3 = arith.constant 0 : index
    %c0_4 = arith.constant 0 : index
    %2 = vector.load %arg1[%c0_3, %c0_4] : memref<32x32xf32, #tpu.memory_space<vmem>>, vector<32x32xf32>
    %cst = arith.constant dense<0.000000e+00> : vector<8x32xf32>
    %3 = tpu.matmul %1, %2, %cst {dimension_numbers = #tpu.dot_dimension_numbers<[1], [0], [0], [1], [0, 0, 1, 1], [], []>} : vector<8x32xf32>, vector<32x32xf32>, vector<8x32xf32> -> vector<8x32xf32>
    %c0_5 = arith.constant 0 : index
    %c0_6 = arith.constant 0 : index
    %4 = vector.load %arg2[%c0_5, %c0_6] : memref<1x32xf32, #tpu.memory_space<vmem>>, vector<1x32xf32>
    %5 = vector.broadcast %4 : vector<1x32xf32> to vector<8x32xf32>
    %6 = arith.addf %3, %5 : vector<8x32xf32>
    %c0_7 = arith.constant 0 : index
    %c0_8 = arith.constant 0 : index
    %7 = vector.load %arg3[%c0_7, %c0_8] : memref<8x32xf32, #tpu.memory_space<vmem>>, vector<8x32xf32>
    %c0_9 = arith.constant 0 : index
    %c0_10 = arith.constant 0 : index
    %8 = vector.load %arg4[%c0_9, %c0_10] : memref<32x32xf32, #tpu.memory_space<vmem>>, vector<32x32xf32>
    %cst_11 = arith.constant dense<0.000000e+00> : vector<8x32xf32>
    %9 = tpu.matmul %7, %8, %cst_11 {dimension_numbers = #tpu.dot_dimension_numbers<[1], [0], [0], [1], [0, 0, 1, 1], [], []>} : vector<8x32xf32>, vector<32x32xf32>, vector<8x32xf32> -> vector<8x32xf32>
    %c0_12 = arith.constant 0 : index
    %c0_13 = arith.constant 0 : index
    %10 = vector.load %arg5[%c0_12, %c0_13] : memref<1x32xf32, #tpu.memory_space<vmem>>, vector<1x32xf32>
    %11 = vector.broadcast %10 : vector<1x32xf32> to vector<8x32xf32>
    %12 = arith.addf %9, %11 : vector<8x32xf32>
    %c0_14 = arith.constant 0 : index
    %c0_15 = arith.constant 0 : index
    %13 = vector.load %arg6[%c0_14, %c0_15] : memref<8x32xf32, #tpu.memory_space<vmem>>, vector<8x32xf32>
    %c0_16 = arith.constant 0 : index
    %c0_17 = arith.constant 0 : index
    %14 = vector.load %arg7[%c0_16, %c0_17] : memref<32x32xf32, #tpu.memory_space<vmem>>, vector<32x32xf32>
    %cst_18 = arith.constant dense<0.000000e+00> : vector<8x32xf32>
    %15 = tpu.matmul %13, %14, %cst_18 {dimension_numbers = #tpu.dot_dimension_numbers<[1], [0], [0], [1], [0, 0, 1, 1], [], []>} : vector<8x32xf32>, vector<32x32xf32>, vector<8x32xf32> -> vector<8x32xf32>
    %16 = arith.addf %12, %15 : vector<8x32xf32>
    %c0_19 = arith.constant 0 : index
    %c0_20 = arith.constant 0 : index
    %17 = vector.load %arg8[%c0_19, %c0_20] : memref<1x32xf32, #tpu.memory_space<vmem>>, vector<1x32xf32>
    %18 = vector.broadcast %17 : vector<1x32xf32> to vector<8x32xf32>
    %19 = arith.addf %16, %18 : vector<8x32xf32>
    %20 = vector.extract_strided_slice %19 {offsets = [0, 0], sizes = [8, 16], strides = [1, 1]} : vector<8x32xf32> to vector<8x16xf32>
    %c0_21 = arith.constant 0 : index
    %21 = memref.load %arg9[%c0_21] : memref<8xf32, #tpu.memory_space<smem>>
    %c2 = arith.constant 2 : index
    %22 = memref.load %arg9[%c2] : memref<8xf32, #tpu.memory_space<smem>>
    %23 = vector.broadcast %0 : vector<8x1xf32> to vector<8x16xf32>
    %24 = arith.mulf %20, %23 : vector<8x16xf32>
    %25 = vector.shape_cast %24 : vector<8x16xf32> to vector<1x8x16xf32>
    %cst_22 = arith.constant dense<0.000000e+00> : vector<1xf32>
    %26 = vector.multi_reduction <add>, %25, %cst_22 [1, 2] : vector<1x8x16xf32> to vector<1xf32>
    %27 = vector.shape_cast %26 : vector<1xf32> to vector<1x1x1xf32>
    %28 = vector.extract %27[0, 0, 0] : f32 from vector<1x1x1xf32>
    %cst_23 = arith.constant 3.125000e-02 : f32
    %29 = arith.mulf %28, %cst_23 : f32
    %30 = vector.broadcast %29 : f32 to vector<8x16xf32>
    %31 = arith.subf %20, %30 : vector<8x16xf32>
    %32 = vector.broadcast %0 : vector<8x1xf32> to vector<8x16xf32>
    %33 = arith.mulf %31, %32 : vector<8x16xf32>
    %34 = arith.mulf %33, %33 : vector<8x16xf32>
    %35 = vector.shape_cast %34 : vector<8x16xf32> to vector<1x8x16xf32>
    %cst_24 = arith.constant dense<0.000000e+00> : vector<1xf32>
    %36 = vector.multi_reduction <add>, %35, %cst_24 [1, 2] : vector<1x8x16xf32> to vector<1xf32>
    %37 = vector.shape_cast %36 : vector<1xf32> to vector<1x1x1xf32>
    %38 = vector.extract %37[0, 0, 0] : f32 from vector<1x1x1xf32>
    %cst_25 = arith.constant 3.125000e-02 : f32
    %39 = arith.mulf %38, %cst_25 : f32
    %40 = vector.broadcast %29 : f32 to vector<8x16xf32>
    %41 = arith.subf %20, %40 : vector<8x16xf32>
    %cst_26 = arith.constant 9.99999974E-6 : f32
    %42 = arith.addf %39, %cst_26 : f32
    %43 = math.rsqrt %42 : f32
    %44 = vector.broadcast %43 : f32 to vector<8x16xf32>
    %45 = arith.mulf %41, %44 : vector<8x16xf32>
    %46 = vector.broadcast %21 : f32 to vector<8x16xf32>
    %47 = arith.mulf %45, %46 : vector<8x16xf32>
    %48 = vector.broadcast %22 : f32 to vector<8x16xf32>
    %49 = arith.addf %47, %48 : vector<8x16xf32>
    %50 = vector.extract_strided_slice %19 {offsets = [0, 16], sizes = [8, 16], strides = [1, 1]} : vector<8x32xf32> to vector<8x16xf32>
    %c1 = arith.constant 1 : index
    %51 = memref.load %arg9[%c1] : memref<8xf32, #tpu.memory_space<smem>>
    %c3 = arith.constant 3 : index
    %52 = memref.load %arg9[%c3] : memref<8xf32, #tpu.memory_space<smem>>
    %53 = vector.broadcast %0 : vector<8x1xf32> to vector<8x16xf32>
    %54 = arith.mulf %50, %53 : vector<8x16xf32>
    %55 = vector.shape_cast %54 : vector<8x16xf32> to vector<1x8x16xf32>
    %cst_27 = arith.constant dense<0.000000e+00> : vector<1xf32>
    %56 = vector.multi_reduction <add>, %55, %cst_27 [1, 2] : vector<1x8x16xf32> to vector<1xf32>
    %57 = vector.shape_cast %56 : vector<1xf32> to vector<1x1x1xf32>
    %58 = vector.extract %57[0, 0, 0] : f32 from vector<1x1x1xf32>
    %cst_28 = arith.constant 3.125000e-02 : f32
    %59 = arith.mulf %58, %cst_28 : f32
    %60 = vector.broadcast %59 : f32 to vector<8x16xf32>
    %61 = arith.subf %50, %60 : vector<8x16xf32>
    %62 = vector.broadcast %0 : vector<8x1xf32> to vector<8x16xf32>
    %63 = arith.mulf %61, %62 : vector<8x16xf32>
    %64 = arith.mulf %63, %63 : vector<8x16xf32>
    %65 = vector.shape_cast %64 : vector<8x16xf32> to vector<1x8x16xf32>
    %cst_29 = arith.constant dense<0.000000e+00> : vector<1xf32>
    %66 = vector.multi_reduction <add>, %65, %cst_29 [1, 2] : vector<1x8x16xf32> to vector<1xf32>
    %67 = vector.shape_cast %66 : vector<1xf32> to vector<1x1x1xf32>
    %68 = vector.extract %67[0, 0, 0] : f32 from vector<1x1x1xf32>
    %cst_30 = arith.constant 3.125000e-02 : f32
    %69 = arith.mulf %68, %cst_30 : f32
    %70 = vector.broadcast %59 : f32 to vector<8x16xf32>
    %71 = arith.subf %50, %70 : vector<8x16xf32>
    %cst_31 = arith.constant 9.99999974E-6 : f32
    %72 = arith.addf %69, %cst_31 : f32
    %73 = math.rsqrt %72 : f32
    %74 = vector.broadcast %73 : f32 to vector<8x16xf32>
    %75 = arith.mulf %71, %74 : vector<8x16xf32>
    %76 = vector.broadcast %51 : f32 to vector<8x16xf32>
    %77 = arith.mulf %75, %76 : vector<8x16xf32>
    %78 = vector.broadcast %52 : f32 to vector<8x16xf32>
    %79 = arith.addf %77, %78 : vector<8x16xf32>
    %80 = vector.extract_strided_slice %6 {offsets = [0, 0], sizes = [8, 16], strides = [1, 1]} : vector<8x32xf32> to vector<8x16xf32>
    %81 = vector.extract_strided_slice %6 {offsets = [0, 16], sizes = [8, 16], strides = [1, 1]} : vector<8x32xf32> to vector<8x16xf32>
    %82 = arith.mulf %49, %80 : vector<8x16xf32>
    %83 = arith.mulf %79, %81 : vector<8x16xf32>
    %84 = arith.subf %82, %83 : vector<8x16xf32>
    %85 = arith.mulf %49, %81 : vector<8x16xf32>
    %86 = arith.mulf %79, %80 : vector<8x16xf32>
    %87 = arith.addf %85, %86 : vector<8x16xf32>
    %c4 = arith.constant 4 : index
    %88 = memref.load %arg9[%c4] : memref<8xf32, #tpu.memory_space<smem>>
    %c6 = arith.constant 6 : index
    %89 = memref.load %arg9[%c6] : memref<8xf32, #tpu.memory_space<smem>>
    %90 = vector.broadcast %0 : vector<8x1xf32> to vector<8x16xf32>
    %91 = arith.mulf %84, %90 : vector<8x16xf32>
    %92 = vector.shape_cast %91 : vector<8x16xf32> to vector<1x8x16xf32>
    %cst_32 = arith.constant dense<0.000000e+00> : vector<1xf32>
    %93 = vector.multi_reduction <add>, %92, %cst_32 [1, 2] : vector<1x8x16xf32> to vector<1xf32>
    %94 = vector.shape_cast %93 : vector<1xf32> to vector<1x1x1xf32>
    %95 = vector.extract %94[0, 0, 0] : f32 from vector<1x1x1xf32>
    %cst_33 = arith.constant 3.125000e-02 : f32
    %96 = arith.mulf %95, %cst_33 : f32
    %97 = vector.broadcast %96 : f32 to vector<8x16xf32>
    %98 = arith.subf %84, %97 : vector<8x16xf32>
    %99 = vector.broadcast %0 : vector<8x1xf32> to vector<8x16xf32>
    %100 = arith.mulf %98, %99 : vector<8x16xf32>
    %101 = arith.mulf %100, %100 : vector<8x16xf32>
    %102 = vector.shape_cast %101 : vector<8x16xf32> to vector<1x8x16xf32>
    %cst_34 = arith.constant dense<0.000000e+00> : vector<1xf32>
    %103 = vector.multi_reduction <add>, %102, %cst_34 [1, 2] : vector<1x8x16xf32> to vector<1xf32>
    %104 = vector.shape_cast %103 : vector<1xf32> to vector<1x1x1xf32>
    %105 = vector.extract %104[0, 0, 0] : f32 from vector<1x1x1xf32>
    %cst_35 = arith.constant 3.125000e-02 : f32
    %106 = arith.mulf %105, %cst_35 : f32
    %107 = vector.broadcast %96 : f32 to vector<8x16xf32>
    %108 = arith.subf %84, %107 : vector<8x16xf32>
    %cst_36 = arith.constant 9.99999974E-6 : f32
    %109 = arith.addf %106, %cst_36 : f32
    %110 = math.rsqrt %109 : f32
    %111 = vector.broadcast %110 : f32 to vector<8x16xf32>
    %112 = arith.mulf %108, %111 : vector<8x16xf32>
    %113 = vector.broadcast %88 : f32 to vector<8x16xf32>
    %114 = arith.mulf %112, %113 : vector<8x16xf32>
    %115 = vector.broadcast %89 : f32 to vector<8x16xf32>
    %116 = arith.addf %114, %115 : vector<8x16xf32>
    %117 = vector.broadcast %0 : vector<8x1xf32> to vector<8x16xf32>
    %118 = arith.mulf %116, %117 : vector<8x16xf32>
    %c0_37 = arith.constant 0 : index
    %c0_38 = arith.constant 0 : index
    %119 = vector.load %arg11[%c0_37, %c0_38] : memref<8x32xf32, #tpu.memory_space<vmem>>, vector<8x16xf32>
    tpu.vector_store %arg11[%c0_37, %c0_38], %118 {strides = array<i32>} : memref<8x32xf32, #tpu.memory_space<vmem>>, vector<8x16xf32>,
    %c5 = arith.constant 5 : index
    %120 = memref.load %arg9[%c5] : memref<8xf32, #tpu.memory_space<smem>>
    %c7 = arith.constant 7 : index
    %121 = memref.load %arg9[%c7] : memref<8xf32, #tpu.memory_space<smem>>
    %122 = vector.broadcast %0 : vector<8x1xf32> to vector<8x16xf32>
    %123 = arith.mulf %87, %122 : vector<8x16xf32>
    %124 = vector.shape_cast %123 : vector<8x16xf32> to vector<1x8x16xf32>
    %cst_39 = arith.constant dense<0.000000e+00> : vector<1xf32>
    %125 = vector.multi_reduction <add>, %124, %cst_39 [1, 2] : vector<1x8x16xf32> to vector<1xf32>
    %126 = vector.shape_cast %125 : vector<1xf32> to vector<1x1x1xf32>
    %127 = vector.extract %126[0, 0, 0] : f32 from vector<1x1x1xf32>
    %cst_40 = arith.constant 3.125000e-02 : f32
    %128 = arith.mulf %127, %cst_40 : f32
    %129 = vector.broadcast %128 : f32 to vector<8x16xf32>
    %130 = arith.subf %87, %129 : vector<8x16xf32>
    %131 = vector.broadcast %0 : vector<8x1xf32> to vector<8x16xf32>
    %132 = arith.mulf %130, %131 : vector<8x16xf32>
    %133 = arith.mulf %132, %132 : vector<8x16xf32>
    %134 = vector.shape_cast %133 : vector<8x16xf32> to vector<1x8x16xf32>
    %cst_41 = arith.constant dense<0.000000e+00> : vector<1xf32>
    %135 = vector.multi_reduction <add>, %134, %cst_41 [1, 2] : vector<1x8x16xf32> to vector<1xf32>
    %136 = vector.shape_cast %135 : vector<1xf32> to vector<1x1x1xf32>
    %137 = vector.extract %136[0, 0, 0] : f32 from vector<1x1x1xf32>
    %cst_42 = arith.constant 3.125000e-02 : f32
    %138 = arith.mulf %137, %cst_42 : f32
    %139 = vector.broadcast %128 : f32 to vector<8x16xf32>
    %140 = arith.subf %87, %139 : vector<8x16xf32>
    %cst_43 = arith.constant 9.99999974E-6 : f32
    %141 = arith.addf %138, %cst_43 : f32
    %142 = math.rsqrt %141 : f32
    %143 = vector.broadcast %142 : f32 to vector<8x16xf32>
    %144 = arith.mulf %140, %143 : vector<8x16xf32>
    %145 = vector.broadcast %120 : f32 to vector<8x16xf32>
    %146 = arith.mulf %144, %145 : vector<8x16xf32>
    %147 = vector.broadcast %121 : f32 to vector<8x16xf32>
    %148 = arith.addf %146, %147 : vector<8x16xf32>
    %149 = vector.broadcast %0 : vector<8x1xf32> to vector<8x16xf32>
    %150 = arith.mulf %148, %149 : vector<8x16xf32>
    %c0_44 = arith.constant 0 : index
    %c16 = arith.constant 16 : index
    %151 = vector.load %arg11[%c0_44, %c16] : memref<8x32xf32, #tpu.memory_space<vmem>>, vector<8x16xf32>
    tpu.vector_store %arg11[%c0_44, %c16], %150 {strides = array<i32>} : memref<8x32xf32, #tpu.memory_space<vmem>>, vector<8x16xf32>,
    return
  }
}

module attributes {stable_mosaic.version = 11 : i64} {
  func.func @score_loss_kernel(%arg0: i32, %arg1: i32, %arg2: memref<8x32xf32, #tpu.memory_space<vmem>>, %arg3: memref<8x1xf32, #tpu.memory_space<vmem>>, %arg4: memref<32x384xbf16, #tpu.memory_space<vmem>>, %arg5: memref<8x384xf32, #tpu.memory_space<vmem>>, %arg6: memref<1x384xf32, #tpu.memory_space<vmem>>, %arg7: memref<8x384xf32, #tpu.memory_space<vmem>>, %arg8: memref<1x8x4xf32, #tpu.memory_space<vmem>>, %arg9: memref<8x4xf32, #tpu.memory_space<vmem>>) attributes {dimension_semantics = [#tpu.dimension_semantics<parallel>, #tpu.dimension_semantics<arbitrary>], iteration_bounds = array<i64: 2, 1>, scalar_prefetch = 0 : i64, scratch_operands = 1 : i64, tpu.core_type = #tpu.core_type<tc>, window_params = [{pipeline_mode = #tpu.pipeline_mode<synchronous>, transform_indices = @transform_0, window_bounds = array<i64: 8, 32>}, {pipeline_mode = #tpu.pipeline_mode<synchronous>, transform_indices = @transform_1, window_bounds = array<i64: 8, 1>}, {transform_indices = @transform_2, window_bounds = array<i64: 32, 384>}, {transform_indices = @transform_3, window_bounds = array<i64: 8, 384>}, {transform_indices = @transform_4, window_bounds = array<i64: 1, 384>}, {transform_indices = @transform_5, window_bounds = array<i64: 8, 384>}, {transform_indices = @transform_6, window_bounds = array<i64: 1, 8, 4>}]} {
    %c0_i32 = arith.constant 0 : i32
    %0 = arith.cmpi eq, %arg1, %c0_i32 : i32
    %1 = arith.extui %0 : i1 to i32
    %c0_i32_0 = arith.constant 0 : i32
    %2 = arith.cmpi ne, %1, %c0_i32_0 : i32
    scf.if %2 {
      %49 = tpu.iota {dimensions = array<i32: 1>} : vector<8x4xi32>
      %c0_i32_27 = arith.constant 0 : i32
      %50 = vector.broadcast %c0_i32_27 : i32 to vector<8x4xi32>
      %51 = arith.cmpi eq, %49, %50 : vector<8x4xi32>
      %cst_28 = arith.constant -1.000000e+30 : f32
      %cst_29 = arith.constant 0.000000e+00 : f32
      %52 = vector.broadcast %cst_28 : f32 to vector<8x4xf32>
      %53 = vector.broadcast %cst_29 : f32 to vector<8x4xf32>
      %54 = arith.select %51, %52, %53 : vector<8x4xi1>, vector<8x4xf32>
      %c0_30 = arith.constant 0 : index
      %c0_31 = arith.constant 0 : index
      %55 = vector.load %arg9[%c0_30, %c0_31] : memref<8x4xf32, #tpu.memory_space<vmem>>, vector<8x4xf32>
      tpu.vector_store %arg9[%c0_30, %c0_31], %54 {strides = array<i32>} : memref<8x4xf32, #tpu.memory_space<vmem>>, vector<8x4xf32>,
    } else {
    }
    %c0 = arith.constant 0 : index
    %c0_1 = arith.constant 0 : index
    %3 = vector.load %arg2[%c0, %c0_1] : memref<8x32xf32, #tpu.memory_space<vmem>>, vector<8x32xf32>
    %4 = arith.truncf %3 : vector<8x32xf32> to vector<8x32xbf16>
    %c0_2 = arith.constant 0 : index
    %c0_3 = arith.constant 0 : index
    %5 = vector.load %arg4[%c0_2, %c0_3] : memref<32x384xbf16, #tpu.memory_space<vmem>>, vector<32x384xbf16>
    %cst = arith.constant dense<0.000000e+00> : vector<8x384xf32>
    %6 = tpu.matmul %4, %5, %cst {dimension_numbers = #tpu.dot_dimension_numbers<[1], [0], [0], [1], [0, 0, 1, 1], [], []>} : vector<8x32xbf16>, vector<32x384xbf16>, vector<8x384xf32> -> vector<8x384xf32>
    %c0_4 = arith.constant 0 : index
    %c0_5 = arith.constant 0 : index
    %7 = vector.load %arg7[%c0_4, %c0_5] : memref<8x384xf32, #tpu.memory_space<vmem>>, vector<8x384xf32>
    tpu.vector_store %arg7[%c0_4, %c0_5], %6 {strides = array<i32>} : memref<8x384xf32, #tpu.memory_space<vmem>>, vector<8x384xf32>,
    %c0_6 = arith.constant 0 : index
    %c0_7 = arith.constant 0 : index
    %8 = vector.load %arg6[%c0_6, %c0_7] : memref<1x384xf32, #tpu.memory_space<vmem>>, vector<1x384xf32>
    %9 = vector.broadcast %8 : vector<1x384xf32> to vector<8x384xf32>
    %10 = arith.addf %6, %9 : vector<8x384xf32>
    %c0_8 = arith.constant 0 : index
    %c0_9 = arith.constant 0 : index
    %11 = vector.load %arg5[%c0_8, %c0_9] : memref<8x384xf32, #tpu.memory_space<vmem>>, vector<8x384xf32>
    %c0_10 = arith.constant 0 : index
    %c0_11 = arith.constant 0 : index
    %12 = vector.load %arg3[%c0_10, %c0_11] : memref<8x1xf32, #tpu.memory_space<vmem>>, vector<8x1xf32>
    %13 = vector.broadcast %12 : vector<8x1xf32> to vector<8x384xf32>
    %14 = arith.mulf %11, %13 : vector<8x384xf32>
    %c0_12 = arith.constant 0 : index
    %c0_13 = arith.constant 0 : index
    %15 = vector.load %arg9[%c0_12, %c0_13] : memref<8x4xf32, #tpu.memory_space<vmem>>, vector<8x1xf32>
    %c0_14 = arith.constant 0 : index
    %c1 = arith.constant 1 : index
    %16 = vector.load %arg9[%c0_14, %c1] : memref<8x4xf32, #tpu.memory_space<vmem>>, vector<8x1xf32>
    %c0_15 = arith.constant 0 : index
    %c2 = arith.constant 2 : index
    %17 = vector.load %arg9[%c0_15, %c2] : memref<8x4xf32, #tpu.memory_space<vmem>>, vector<8x1xf32>
    %c0_16 = arith.constant 0 : index
    %c3 = arith.constant 3 : index
    %18 = vector.load %arg9[%c0_16, %c3] : memref<8x4xf32, #tpu.memory_space<vmem>>, vector<8x1xf32>
    %cst_17 = arith.constant dense<0xFF800000> : vector<8xf32>
    %19 = vector.multi_reduction <maximumf>, %10, %cst_17 [1] : vector<8x384xf32> to vector<8xf32>
    %20 = vector.shape_cast %19 : vector<8xf32> to vector<8x1xf32>
    %21 = arith.maximumf %15, %20 : vector<8x1xf32>
    %22 = arith.subf %15, %21 : vector<8x1xf32>
    %23 = math.exp %22 : vector<8x1xf32>
    %24 = arith.mulf %16, %23 : vector<8x1xf32>
    %25 = vector.broadcast %21 : vector<8x1xf32> to vector<8x384xf32>
    %26 = arith.subf %10, %25 : vector<8x384xf32>
    %27 = math.exp %26 : vector<8x384xf32>
    %cst_18 = arith.constant dense<0.000000e+00> : vector<8xf32>
    %28 = vector.multi_reduction <add>, %27, %cst_18 [1] : vector<8x384xf32> to vector<8xf32>
    %29 = vector.shape_cast %28 : vector<8xf32> to vector<8x1xf32>
    %30 = arith.addf %24, %29 : vector<8x1xf32>
    %cst_19 = arith.constant 0.000000e+00 : f32
    %31 = vector.broadcast %cst_19 : f32 to vector<8x384xf32>
    %32 = arith.cmpf ogt, %14, %31 : vector<8x384xf32>
    %33 = math.log %14 : vector<8x384xf32>
    %34 = arith.subf %33, %6 : vector<8x384xf32>
    %35 = arith.mulf %14, %34 : vector<8x384xf32>
    %cst_20 = arith.constant 0.000000e+00 : f32
    %36 = vector.broadcast %cst_20 : f32 to vector<8x384xf32>
    %37 = arith.select %32, %35, %36 : vector<8x384xi1>, vector<8x384xf32>
    %cst_21 = arith.constant dense<0.000000e+00> : vector<8xf32>
    %38 = vector.multi_reduction <add>, %37, %cst_21 [1] : vector<8x384xf32> to vector<8xf32>
    %39 = vector.shape_cast %38 : vector<8xf32> to vector<8x1xf32>
    %40 = arith.addf %17, %39 : vector<8x1xf32>
    %cst_22 = arith.constant dense<0.000000e+00> : vector<8xf32>
    %41 = vector.multi_reduction <add>, %14, %cst_22 [1] : vector<8x384xf32> to vector<8xf32>
    %42 = vector.shape_cast %41 : vector<8xf32> to vector<8x1xf32>
    %43 = arith.addf %18, %42 : vector<8x1xf32>
    %44 = tpu.concatenate %21, %30, %40, %43 in 1 : vector<8x1xf32>, vector<8x1xf32>, vector<8x1xf32>, vector<8x1xf32> -> vector<8x4xf32>
    %c0_23 = arith.constant 0 : index
    %c0_24 = arith.constant 0 : index
    %45 = vector.load %arg9[%c0_23, %c0_24] : memref<8x4xf32, #tpu.memory_space<vmem>>, vector<8x4xf32>
    tpu.vector_store %arg9[%c0_23, %c0_24], %44 {strides = array<i32>} : memref<8x4xf32, #tpu.memory_space<vmem>>, vector<8x4xf32>,
    %c0_i32_25 = arith.constant 0 : i32
    %46 = arith.cmpi eq, %arg1, %c0_i32_25 : i32
    %47 = arith.extui %46 : i1 to i32
    %c0_i32_26 = arith.constant 0 : i32
    %48 = arith.cmpi ne, %47, %c0_i32_26 : i32
    scf.if %48 {
      %c0_27 = arith.constant 0 : index
      %c0_28 = arith.constant 0 : index
      %c0_29 = arith.constant 0 : index
      %49 = vector.load %arg8[%c0_27, %c0_28, %c0_29] : memref<1x8x4xf32, #tpu.memory_space<vmem>>, vector<1x8x4xf32>
      %50 = vector.shape_cast %49 : vector<1x8x4xf32> to vector<8x4xf32>
      %51 = vector.shape_cast %44 : vector<8x4xf32> to vector<1x8x4xf32>
      tpu.vector_store %arg8[%c0_27, %c0_28, %c0_29], %51 {strides = array<i32>} : memref<1x8x4xf32, #tpu.memory_space<vmem>>, vector<1x8x4xf32>,
    } else {
    }
    return
  }
  func.func @transform_0(%arg0: i32, %arg1: i32) -> (i32, i32) {
    %c0_i32 = arith.constant 0 : i32
    %c0_i32_0 = arith.constant 0 : i32
    %c0_i32_1 = arith.constant 0 : i32
    return %c0_i32, %c0_i32_0 : i32, i32
  }
  func.func @transform_1(%arg0: i32, %arg1: i32) -> (i32, i32) {
    %c0_i32 = arith.constant 0 : i32
    %c0_i32_0 = arith.constant 0 : i32
    %c0_i32_1 = arith.constant 0 : i32
    return %c0_i32, %c0_i32_0 : i32, i32
  }
  func.func @transform_2(%arg0: i32, %arg1: i32) -> (i32, i32) {
    %c1_i32 = arith.constant 1 : i32
    %0 = arith.muli %arg0, %c1_i32 : i32
    %1 = arith.addi %0, %arg1 : i32
    %c0_i32 = arith.constant 0 : i32
    %c0_i32_0 = arith.constant 0 : i32
    return %c0_i32, %1 : i32, i32
  }
  func.func @transform_3(%arg0: i32, %arg1: i32) -> (i32, i32) {
    %c1_i32 = arith.constant 1 : i32
    %0 = arith.muli %arg0, %c1_i32 : i32
    %1 = arith.addi %0, %arg1 : i32
    %c0_i32 = arith.constant 0 : i32
    %c0_i32_0 = arith.constant 0 : i32
    return %c0_i32, %1 : i32, i32
  }
  func.func @transform_4(%arg0: i32, %arg1: i32) -> (i32, i32) {
    %c1_i32 = arith.constant 1 : i32
    %0 = arith.muli %arg0, %c1_i32 : i32
    %1 = arith.addi %0, %arg1 : i32
    %c0_i32 = arith.constant 0 : i32
    %c0_i32_0 = arith.constant 0 : i32
    return %c0_i32, %1 : i32, i32
  }
  func.func @transform_5(%arg0: i32, %arg1: i32) -> (i32, i32) {
    %c1_i32 = arith.constant 1 : i32
    %0 = arith.muli %arg0, %c1_i32 : i32
    %1 = arith.addi %0, %arg1 : i32
    %c0_i32 = arith.constant 0 : i32
    %c0_i32_0 = arith.constant 0 : i32
    return %c0_i32, %1 : i32, i32
  }
  func.func @transform_6(%arg0: i32, %arg1: i32) -> (i32, i32, i32) {
    %c0_i32 = arith.constant 0 : i32
    %c0_i32_0 = arith.constant 0 : i32
    %c0_i32_1 = arith.constant 0 : i32
    return %arg0, %c0_i32, %c0_i32_0 : i32, i32, i32
  }
}

</mosaic_0001>

<llo_original>
// kernel: relation_extractor_forward.3
$region0: #{relation_extractor_forward.3}
  #allocation0 [shape = 'u32[]', space=smem, size = 0x4, offset = 0x4, fixed_abs, tag = 'smem constant byte address 0x4 - core index']
  #allocation1 [shape = 'u32[144,128]{1,0:T(1,128)}', space=vmem, size = 0x12000, scoped, tag = 'internal scratch']
  #allocation2 [shape = 'f32[8,4]{1,0:T(8,128)}', space=vmem, size = 0x1000, scoped, tag = 'scratch operand']
  %s0 = inlined_call_operand.vmem [shape: f32[8,32], index: 0, kind: input, shape index: {}]
  %s1 = inlined_call_operand.vmem [shape: f32[8,1], index: 1, kind: input, shape index: {}]
  %s2 = inlined_call_operand.vmem [shape: bf16[32,768], index: 2, kind: input, shape index: {}]
  %s3 = inlined_call_operand.vmem [shape: f32[8,768], index: 3, kind: input, shape index: {}]
  %s4 = inlined_call_operand.vmem [shape: f32[1,768], index: 4, kind: input, shape index: {}]
  %s5 = inlined_call_operand.vmem [shape: f32[8,768], index: 5, kind: output, shape index: {0}]
  %s6 = inlined_call_operand.vmem [shape: f32[2,8,4], index: 6, kind: output, shape index: {1}]
  %7 = xla_tuple %s5, %s6
  %s8 = sld [smem:[#allocation0]]
  $region95: #{relation_extractor_forward.3} parent=0
    _
  %s10 = ssub.s32 1, %s8
  %s11 = scalar_select 0, %s10, %s8
  $region1: #{relation_extractor_forward.3} parent=0
    #allocation3 [shape = 'u8[49152]{0}', space=vmem, size = 0xc000, scoped, tag = 'input window, operand 2']
    loop: start=0, step=1, limit=4
    $region2: #{relation_extractor_forward.3} parent=1 // loop_pre_header
      _
    $region3: #{relation_extractor_forward.3} parent=1 // loop_header
      %s13 = sphi 0, %s17
      %p14 = scmp.ge.s32.totalorder %s13, 4
      %s20 = sphi 0, %s32
      %s21 = sphi 0, %s28
      %s22 = sphi 0, %s20
      %s23 = sphi 0, %s21
      %s24 = sphi 0, %s22
      %s25 = sphi 0, %s23
      %s33 = sphi 0, %s33
      %s35 = sphi 0, %s33
      %s36 = sphi 0, %s35
      %s50 = sphi 0, %s36
      %s54 = sphi 0, %s54
      %s56 = sphi 0, %s54
      %s57 = sphi 0, %s56
      %s71 = sphi 0, %s57
      %s79 = sphi 0, %s81
      %s82 = sphi 0, %s79
      %s83 = sphi 0, %s82
      %s99 = sphi 0, %s83
      %s107 = sphi 0, %s109
      %s110 = sphi 0, %s107
      %s111 = sphi 0, %s110
      %s127 = sphi 0, %s111
      %s135 = sphi 0, %s137
      %s138 = sphi 0, %s135
      %s139 = sphi 0, %s138
      %s155 = sphi 0, %s139
      %s163 = sphi 0, %s165
      %s166 = sphi 0, %s163
      %s167 = sphi 0, %s166
      %s183 = sphi 0, %s167
      %s189 = sphi 0, %s191
      %s192 = sphi 0, %s189
      %s193 = sphi 0, %s192
      %s209 = sphi 0, %s193
    $region4: #{relation_extractor_forward.3} parent=1 // loop_header_branch
      %16 = sbr.rel (%p14) target = $region8
    $region5: #{relation_extractor_forward.3} parent=1 // loop_body
      %s18 = ssub.s32 %s13, 1
      %s19 = ssub.s32 %s13, 2
      %s26 = sadd.s32 1, %s21
      %p27 = scmp.ge.s32.totalorder %s26, 1
      %s28 = scalar_select %p27, 0, %s26
      %s29 = sadd.s32 1, %s20
      %s30 = scalar_select %p27, %s29, %s20
      %p31 = scmp.ge.s32.totalorder %s30, 2
      %s32 = scalar_select %p31, 0, %s30
      %s34 = sadd.s32 %s33, 1
      %p37 = scmp.eq.s32.totalorder %s13, 1
      %p38 = scmp.ne.s32.totalorder %s33, %s35
      %p39 = scmp.eq.s32.totalorder %s13, 0
      %p40 = por %p38, %p39
      %p41 = scmp.ne.s32.totalorder %s33, %s35
      %p42 = scmp.eq.s32.totalorder %s18, 1
      %p43 = por %p41, %p42
      %p44 = scmp.ne.s32.totalorder %s35, %s36
      %p45 = scmp.eq.s32.totalorder %s18, 0
      %p46 = por %p44, %p45
      %p47 = scmp.ne.s32.totalorder %s35, %s36
      %p48 = scmp.eq.s32.totalorder %s19, 1
      %p49 = por %p47, %p48
      %p51 = scmp.ne.s32.totalorder %s36, %s50
      %p52 = scmp.eq.s32.totalorder %s19, 0
      %p53 = por %p51, %p52
      %s55 = sadd.s32 %s54, 1
      %p58 = scmp.eq.s32.totalorder %s13, 1
      %p59 = scmp.ne.s32.totalorder %s54, %s56
      %p60 = scmp.eq.s32.totalorder %s13, 0
      %p61 = por %p59, %p60
      %p62 = scmp.ne.s32.totalorder %s54, %s56
      %p63 = scmp.eq.s32.totalorder %s18, 1
      %p64 = por %p62, %p63
      %p65 = scmp.ne.s32.totalorder %s56, %s57
      %p66 = scmp.eq.s32.totalorder %s18, 0
      %p67 = por %p65, %p66
      %p68 = scmp.ne.s32.totalorder %s56, %s57
      %p69 = scmp.eq.s32.totalorder %s19, 1
      %p70 = por %p68, %p69
      %p72 = scmp.ne.s32.totalorder %s57, %s71
      %p73 = scmp.eq.s32.totalorder %s19, 0
      %p74 = por %p72, %p73
      %s75 = sadd.s32 %s20, %s21
      %s76 = sadd.s32 %s32, %s28
      %s77 = ssub.s32 %s75, %s76
      %p78 = scmp.eq.s32.totalorder %s77, 0
      %s80 = sadd.s32 %s79, 1
      %s81 = scalar_select %p78, %s79, %s80
      %p84 = pneg %p78
      %p85 = scmp.eq.s32.totalorder %s13, 1
      %p86 = por %p84, %p85
      %p87 = scmp.ne.s32.totalorder %s79, %s82
      %p88 = scmp.eq.s32.totalorder %s13, 0
      %p89 = por %p87, %p88
      %p90 = scmp.ne.s32.totalorder %s79, %s82
      %p91 = scmp.eq.s32.totalorder %s18, 1
      %p92 = por %p90, %p91
      %p93 = scmp.ne.s32.totalorder %s82, %s83
      %p94 = scmp.eq.s32.totalorder %s18, 0
      %p95 = por %p93, %p94
      %p96 = scmp.ne.s32.totalorder %s82, %s83
      %p97 = scmp.eq.s32.totalorder %s19, 1
      %p98 = por %p96, %p97
      %p100 = scmp.ne.s32.totalorder %s83, %s99
      %p101 = scmp.eq.s32.totalorder %s19, 0
      %p102 = por %p100, %p101
      %s103 = sadd.s32 %s20, %s21
      %s104 = sadd.s32 %s32, %s28
      %s105 = ssub.s32 %s103, %s104
      %p106 = scmp.eq.s32.totalorder %s105, 0
      %s108 = sadd.s32 %s107, 1
      %s109 = scalar_select %p106, %s107, %s108
      %p112 = pneg %p106
      %p113 = scmp.eq.s32.totalorder %s13, 1
      %p114 = por %p112, %p113
      %p115 = scmp.ne.s32.totalorder %s107, %s110
      %p116 = scmp.eq.s32.totalorder %s13, 0
      %p117 = por %p115, %p116
      %p118 = scmp.ne.s32.totalorder %s107, %s110
      %p119 = scmp.eq.s32.totalorder %s18, 1
      %p120 = por %p118, %p119
      %p121 = scmp.ne.s32.totalorder %s110, %s111
      %p122 = scmp.eq.s32.totalorder %s18, 0
      %p123 = por %p121, %p122
      %p124 = scmp.ne.s32.totalorder %s110, %s111
      %p125 = scmp.eq.s32.totalorder %s19, 1
      %p126 = por %p124, %p125
      %p128 = scmp.ne.s32.totalorder %s111, %s127
      %p129 = scmp.eq.s32.totalorder %s19, 0
      %p130 = por %p128, %p129
      %s131 = sadd.s32 %s20, %s21
      %s132 = sadd.s32 %s32, %s28
      %s133 = ssub.s32 %s131, %s132
      %p134 = scmp.eq.s32.totalorder %s133, 0
      %s136 = sadd.s32 %s135, 1
      %s137 = scalar_select %p134, %s135, %s136
      %p140 = pneg %p134
      %p141 = scmp.eq.s32.totalorder %s13, 1
      %p142 = por %p140, %p141
      %p143 = scmp.ne.s32.totalorder %s135, %s138
      %p144 = scmp.eq.s32.totalorder %s13, 0
      %p145 = por %p143, %p144
      %p146 = scmp.ne.s32.totalorder %s135, %s138
      %p147 = scmp.eq.s32.totalorder %s18, 1
      %p148 = por %p146, %p147
      %p149 = scmp.ne.s32.totalorder %s138, %s139
      %p150 = scmp.eq.s32.totalorder %s18, 0
      %p151 = por %p149, %p150
      %p152 = scmp.ne.s32.totalorder %s138, %s139
      %p153 = scmp.eq.s32.totalorder %s19, 1
      %p154 = por %p152, %p153
      %p156 = scmp.ne.s32.totalorder %s139, %s155
      %p157 = scmp.eq.s32.totalorder %s19, 0
      %p158 = por %p156, %p157
      %s159 = sadd.s32 %s20, %s21
      %s160 = sadd.s32 %s32, %s28
      %s161 = ssub.s32 %s159, %s160
      %p162 = scmp.eq.s32.totalorder %s161, 0
      %s164 = sadd.s32 %s163, 1
      %s165 = scalar_select %p162, %s163, %s164
      %p168 = pneg %p162
      %p169 = scmp.eq.s32.totalorder %s13, 1
      %p170 = por %p168, %p169
      %p171 = scmp.ne.s32.totalorder %s163, %s166
      %p172 = scmp.eq.s32.totalorder %s13, 0
      %p173 = por %p171, %p172
      %p174 = scmp.ne.s32.totalorder %s163, %s166
      %p175 = scmp.eq.s32.totalorder %s18, 1
      %p176 = por %p174, %p175
      %p177 = scmp.ne.s32.totalorder %s166, %s167
      %p178 = scmp.eq.s32.totalorder %s18, 0
      %p179 = por %p177, %p178
      %p180 = scmp.ne.s32.totalorder %s166, %s167
      %p181 = scmp.eq.s32.totalorder %s19, 1
      %p182 = por %p180, %p181
      %p184 = scmp.ne.s32.totalorder %s167, %s183
      %p185 = scmp.eq.s32.totalorder %s19, 0
      %p186 = por %p184, %p185
      %s187 = ssub.s32 %s20, %s32
      %p188 = scmp.eq.s32.totalorder %s187, 0
      %s190 = sadd.s32 %s189, 1
      %s191 = scalar_select %p188, %s189, %s190
      %p194 = pneg %p188
      %p195 = scmp.eq.s32.totalorder %s13, 1
      %p196 = por %p194, %p195
      %p197 = scmp.ne.s32.totalorder %s189, %s192
      %p198 = scmp.eq.s32.totalorder %s13, 0
      %p199 = por %p197, %p198
      %p200 = scmp.ne.s32.totalorder %s189, %s192
      %p201 = scmp.eq.s32.totalorder %s18, 1
      %p202 = por %p200, %p201
      %p203 = scmp.ne.s32.totalorder %s192, %s193
      %p204 = scmp.eq.s32.totalorder %s18, 0
      %p205 = por %p203, %p204
      %p206 = scmp.ne.s32.totalorder %s192, %s193
      %p207 = scmp.eq.s32.totalorder %s19, 1
      %p208 = por %p206, %p207
      %p210 = scmp.ne.s32.totalorder %s193, %s209
      %p211 = scmp.eq.s32.totalorder %s19, 0
      %p212 = por %p210, %p211
      %p213 = scmp.le.s32.totalorder 1, %s13
      %p214 = scmp.lt.s32.totalorder %s13, 3
      %p215 = pnand %p213, %p214
      %p216 = pneg %p215
      // Predicated region
      $region9: #{relation_extractor_forward.3} parent=5 // pred_check
        _
      $region10: #{relation_extractor_forward.3} parent=5 // pred_check_branch
        %218 = sbr.rel (%p215) target = $region12
      $region11: #{relation_extractor_forward.3} parent=5 // pred_region
        %s219 = ssub.s32 %s13, 1
        // Predicated region
        $region13: #{relation_extractor_forward.3} parent=11 // pred_check
          %p220 = pneg %p46
        $region14: #{relation_extractor_forward.3} parent=11 // pred_check_branch
          %222 = sbr.rel (%p220) target = $region16
        $region15: #{relation_extractor_forward.3} parent=11 // pred_region
          _
        $region16: #{relation_extractor_forward.3} parent=11 // pred_fallthru
          _
        // Predicated region
        $region17: #{relation_extractor_forward.3} parent=11 // pred_check
          %p223 = pneg %p67
        $region18: #{relation_extractor_forward.3} parent=11 // pred_check_branch
          %225 = sbr.rel (%p223) target = $region20
        $region19: #{relation_extractor_forward.3} parent=11 // pred_region
          _
        $region20: #{relation_extractor_forward.3} parent=11 // pred_fallthru
          _
      $region12: #{relation_extractor_forward.3} parent=5 // pred_fallthru
        _
      %p226 = scmp.lt.s32.totalorder %s13, 2
      // Predicated region
      $region21: #{relation_extractor_forward.3} parent=5 // pred_check
        %p227 = pneg %p226
      $region22: #{relation_extractor_forward.3} parent=5 // pred_check_branch
        %229 = sbr.rel (%p227) target = $region24
      $region23: #{relation_extractor_forward.3} parent=5 // pred_region
        // Predicated region
        $region25: #{relation_extractor_forward.3} parent=23 // pred_check
          %p230 = pneg %p89
        $region26: #{relation_extractor_forward.3} parent=23 // pred_check_branch
          %232 = sbr.rel (%p230) target = $region28
        $region27: #{relation_extractor_forward.3} parent=23 // pred_region
          %s233 = sand.u32 %s79, 1
          %s234 = sand.u32 %s79, 1
          %s235 = smul.addr %s234, 48
          %s236 = scalar_lea.vmem [#allocation3], %s235
          %s237 = sadd.s32 %s20, %s21
          %s238 = smul.u32 3, %s237
          %s239 = smul.addr %s238, 4
          %s240 = scalar_lea.vmem %s2, %s239
          // Predicated region
          $region29: #{relation_extractor_forward.3} parent=27 // pred_check
            _
          $region30: #{relation_extractor_forward.3} parent=27 // pred_check_branch
            %242 = sbr.rel (0) target = $region32
          $region31: #{relation_extractor_forward.3} parent=27 // pred_region
            // Predicated region
            $region33: #{relation_extractor_forward.3} parent=31 // pred_check
              _
            $region34: #{relation_extractor_forward.3} parent=31 // pred_check_branch
              %244 = sbr.rel (0) target = $region36
            $region35: #{relation_extractor_forward.3} parent=31 // pred_region
              %s245 = scalar_lea.vmem %s240, 8
              %s246 = scalar_lea.vmem %s236, 8 [#allocation3]
              loop: start=0, step=1, limit=1
              $region37: #{relation_extractor_forward.3} parent=35 // loop_pre_header
                _
              $region38: #{relation_extractor_forward.3} parent=35 // loop_header
                %s248 = sphi 0, %s252
                %p249 = scmp.ge.s32.totalorder %s248, 1
                %s253 = sphi %s240, %s240
                %s254 = sphi %s236, %s236
              $region39: #{relation_extractor_forward.3} parent=35 // loop_header_branch
                %251 = sbr.rel (%p249) target = $region43
              $region40: #{relation_extractor_forward.3} parent=35 // loop_body
                %v255 = vld [vmem:[%s253] sm:$0xff]
                %256 = vst [vmem:[%s254] sm:$0xff] %v255
                %v257 = vld [vmem:[%s253 + $0x18] sm:$0xff]
                %258 = vst [vmem:[%s254 + $0xc] sm:$0xff] %v257
                %v259 = vld [vmem:[%s253 + $0x30] sm:$0xff]
                %260 = vst [vmem:[%s254 + $0x18] sm:$0xff] %v259
                %v261 = vld [vmem:[%s253 + $0x48] sm:$0xff]
                %262 = vst [vmem:[%s254 + $0x24] sm:$0xff] %v261
              $region41: #{relation_extractor_forward.3} parent=35 // loop_footer
                %s252 = sadd.s32 1, %s248
              $region42: #{relation_extractor_forward.3} parent=35 // loop_footer_branch
                %247 = sbr.rel target = $region38
              $region43: #{relation_extractor_forward.3} parent=35 // loop_exit
                _
              %s264 = ssub.s32 16, 1
              loop: start=0, step=1, limit=1
              $region44: #{relation_extractor_forward.3} parent=35 // loop_pre_header
                _
              $region45: #{relation_extractor_forward.3} parent=35 // loop_header
                %s266 = sphi 0, %s270
                %p267 = scmp.ge.s32.totalorder %s266, 1
                %s271 = sphi %s245, %s245
                %s272 = sphi %s246, %s246
              $region46: #{relation_extractor_forward.3} parent=35 // loop_header_branch
                %269 = sbr.rel (%p267) target = $region50
              $region47: #{relation_extractor_forward.3} parent=35 // loop_body
                %v273 = vld [vmem:[%s271] sm:%s264]
                %274 = vst [vmem:[%s272] sm:%s264] %v273
                %v275 = vld [vmem:[%s271 + $0x18] sm:%s264]
                %276 = vst [vmem:[%s272 + $0xc] sm:%s264] %v275
                %v277 = vld [vmem:[%s271 + $0x30] sm:%s264]
                %278 = vst [vmem:[%s272 + $0x18] sm:%s264] %v277
                %v279 = vld [vmem:[%s271 + $0x48] sm:%s264]
                %280 = vst [vmem:[%s272 + $0x24] sm:%s264] %v279
              $region48: #{relation_extractor_forward.3} parent=35 // loop_footer
                %s270 = sadd.s32 1, %s266
              $region49: #{relation_extractor_forward.3} parent=35 // loop_footer_branch
                %265 = sbr.rel target = $region45
              $region50: #{relation_extractor_forward.3} parent=35 // loop_exit
                _
            $region36: #{relation_extractor_forward.3} parent=31 // pred_fallthru
              _
          $region32: #{relation_extractor_forward.3} parent=27 // pred_fallthru
            _
          %281 = vnop
        $region28: #{relation_extractor_forward.3} parent=23 // pred_fallthru
          _
        // Predicated region
        $region51: #{relation_extractor_forward.3} parent=23 // pred_check
          %p282 = pneg %p117
        $region52: #{relation_extractor_forward.3} parent=23 // pred_check_branch
          %284 = sbr.rel (%p282) target = $region54
        $region53: #{relation_extractor_forward.3} parent=23 // pred_region
          %s285 = sadd.s32 %s20, %s21
          %s286 = smul.u32 3, %s285
          %p287 = scmp.lt.s32.totalorder %s286, 5
          %s288 = scalar_select %p287, %s286, 5
          %s289 = smul.addr %s288, 8
          %s290 = scalar_lea.vmem %s3, %s289
          %s291 = sadd.s32 %s20, %s21
          %s292 = smul.u32 3, %s291
        $region54: #{relation_extractor_forward.3} parent=23 // pred_fallthru
          _
        // Predicated region
        $region55: #{relation_extractor_forward.3} parent=23 // pred_check
          %p293 = pneg %p145
        $region56: #{relation_extractor_forward.3} parent=23 // pred_check_branch
          %295 = sbr.rel (%p293) target = $region58
        $region57: #{relation_extractor_forward.3} parent=23 // pred_region
          %s296 = sadd.s32 %s20, %s21
          %s297 = smul.u32 3, %s296
          %p298 = scmp.lt.s32.totalorder %s297, 5
          %s299 = scalar_select %p298, %s297, 5
          %s300 = scalar_lea.vmem %s4, %s299
          %s301 = sadd.s32 %s20, %s21
          %s302 = smul.u32 3, %s301
        $region58: #{relation_extractor_forward.3} parent=23 // pred_fallthru
          _
      $region24: #{relation_extractor_forward.3} parent=5 // pred_fallthru
        _
      %p303 = scmp.le.s32.totalorder 1, %s13
      %p304 = scmp.lt.s32.totalorder %s13, 3
      %p305 = pnand %p303, %p304
      %p306 = pneg %p305
      // Predicated region
      $region59: #{relation_extractor_forward.3} parent=5 // pred_check
        _
      $region60: #{relation_extractor_forward.3} parent=5 // pred_check_branch
        %308 = sbr.rel (%p305) target = $region62
      $region61: #{relation_extractor_forward.3} parent=5 // pred_region
        %s309 = ssub.s32 %s13, 1
        %s310 = sand.u32 %s82, 1
        %s311 = sand.u32 %s82, 1
        %s312 = smul.addr %s311, 48
        %s313 = scalar_lea.vmem [#allocation3], %s312
        // Predicated region
        $region63: #{relation_extractor_forward.3} parent=61 // pred_check
          %p314 = pneg %p95
        $region64: #{relation_extractor_forward.3} parent=61 // pred_check_branch
          %316 = sbr.rel (%p314) target = $region66
        $region65: #{relation_extractor_forward.3} parent=61 // pred_region
          _
        $region66: #{relation_extractor_forward.3} parent=61 // pred_fallthru
          _
        %p317 = pneg %p46
        %p318 = pneg %p43
        %p319 = pneg %p67
        %p320 = pneg %p64
        %s321 = sand.u32 %s82, 1
        %s322 = sand.u32 %s82, 1
        %s323 = smul.addr %s322, 48
        %s324 = scalar_lea.vmem [#allocation3], %s323
        %p325 = pneg %p95
        %p326 = pneg %p92
        %s327 = sadd.s32 %s22, %s23
        %s328 = smul.u32 3, %s327
        %p329 = scmp.lt.s32.totalorder %s328, 5
        %s330 = scalar_select %p329, %s328, 5
        %s331 = smul.addr %s330, 8
        %s332 = scalar_lea.vmem %s3, %s331
        %p333 = pneg %p123
        %p334 = pneg %p120
        %s335 = sadd.s32 %s22, %s23
        %s336 = smul.u32 3, %s335
        %p337 = scmp.lt.s32.totalorder %s336, 5
        %s338 = scalar_select %p337, %s336, 5
        %s339 = scalar_lea.vmem %s4, %s338
        %p340 = pneg %p151
        %p341 = pneg %p148
        %p342 = pneg %p179
        %p343 = pneg %p176
        %s344 = sadd.s32 %s22, %s23
        %s345 = smul.u32 3, %s344
        %p346 = scmp.lt.s32.totalorder %s345, 5
        %s347 = scalar_select %p346, %s345, 5
        %s348 = smul.addr %s347, 8
        %s349 = scalar_lea.vmem %s5, %s348
        %p350 = pneg %p205
        %p351 = pneg %p202
        %p352 = scmp.lt.s32.totalorder %s22, 1
        %s353 = scalar_select %p352, %s22, 1
        %s354 = smul.addr %s353, 8
        %s355 = scalar_lea.vmem %s6, %s354
        %s356 = sadd.s32 %s22, %s23
        %s357 = smul.u32 3, %s356
        %s358 = sadd.s32 %s22, %s23
        %s359 = smul.u32 3, %s358
        %p360 = scmp.lt.s32.totalorder %s359, 5
        %s361 = scalar_select %p360, %s359, 5
        %s362 = smul.addr %s361, 8
        %s363 = scalar_lea.vmem %s3, %s362
        %s364 = sadd.s32 %s22, %s23
        %s365 = smul.u32 3, %s364
        %s366 = sadd.s32 %s22, %s23
        %s367 = smul.u32 3, %s366
        %p368 = scmp.lt.s32.totalorder %s367, 5
        %s369 = scalar_select %p368, %s367, 5
        %s370 = scalar_lea.vmem %s4, %s369
        %s371 = sadd.s32 %s22, %s23
        %s372 = smul.u32 3, %s371
        %s373 = sadd.s32 %s22, %s23
        %s374 = smul.u32 3, %s373
        %p375 = scmp.lt.s32.totalorder %s374, 5
        %s376 = scalar_select %p375, %s374, 5
        %s377 = smul.addr %s376, 8
        %s378 = scalar_lea.vmem %s5, %s377
        %s379 = sadd.s32 %s22, %s23
        %s380 = smul.u32 3, %s379
        %p381 = scmp.lt.s32.totalorder %s22, 1
        %s382 = scalar_select %p381, %s22, 1
        %s383 = smul.addr %s382, 8
        %s384 = scalar_lea.vmem %s6, %s383
        %p386 = scmp.eq.s32.totalorder %s23, 0
        // Predicated region
        $region67: #{relation_extractor_forward.3} parent=61 // pred_check
          %p387 = pneg %p386
        $region68: #{relation_extractor_forward.3} parent=61 // pred_check_branch
          %389 = sbr.rel (%p387) target = $region70
        $region69: #{relation_extractor_forward.3} parent=61 // pred_region
          %v390 = vlaneseq
          %v391 = vand.u32 %v390, 127
          %vm392 = vcmp.eq.s32.totalorder %v391, 0
          %v393 = vsel %vm392, -1e+30, 0.0
          %vm394 = vcmask 31744
          %395 = vst.msk [vmem:[#allocation2] sm:$0xff] %vm394, %v393
        $region70: #{relation_extractor_forward.3} parent=61 // pred_fallthru
          _
        %v396 = vld [vmem:[%s0] sm:$0xff]
        %v397 = vpack.c.bf16 %v396, %v396
        %v398 = vld [vmem:[%s313] sm:$0xff]
        %v399 = vld [vmem:[%s313 + $0x8] sm:$0xf]
        %v400 = vld [vmem:[%s313 + $0xc] sm:$0xff]
        %v401 = vld [vmem:[%s313 + $0x14] sm:$0xf]
        %v402 = vld [vmem:[%s313 + $0x18] sm:$0xff]
        %v403 = vld [vmem:[%s313 + $0x20] sm:$0xf]
        %v404 = vld [vmem:[%s313 + $0x24] sm:$0xff]
        %v405 = vld [vmem:[%s313 + $0x2c] sm:$0xf]
        %v414 = vunpack.c.l.b16 %v398
        %v415 = vunpack.c.h.b16 %v398
        %v416 = vunpack.c.l.b16 %v399
        %v417 = vunpack.c.l.b16 %v400
        %v418 = vunpack.c.h.b16 %v400
        %v419 = vunpack.c.l.b16 %v401
        %v420 = vunpack.c.l.b16 %v402
        %v421 = vunpack.c.h.b16 %v402
        %v422 = vunpack.c.l.b16 %v403
        %v423 = vunpack.c.l.b16 %v404
        %v424 = vunpack.c.h.b16 %v404
        %v425 = vunpack.c.l.b16 %v405
        %v426 = vpack.c.b16 %v417, %v414
        %v427 = vpack.c.b16 %v418, %v415
        %v428 = vpack.c.b16 %v419, %v416
        %v429 = vpack.c.b16 %v423, %v420
        %v430 = vpack.c.b16 %v424, %v421
        %v431 = vpack.c.b16 %v425, %v422
        %vm438 = vcmask 261120
        %v440 = vsel %vm438, %v397, 0
        %442 = vmatprep.subr.bf16.mxu0 0
        %443 = vmatpush1.bf16.msra.mxu0 0
        %444 = vmatprep.subr.bf16.mxu0 0
        %445 = vmatpush1.bf16.msra.mxu0 0
        %446 = vmatprep.subr.bf16.mxu0 0
        %447 = vmatpush1.bf16.msra.mxu0 0
        %448 = vmatprep.subr.bf16.mxu0 0
        %449 = vmatpush1.bf16.msra.mxu0 0
        %450 = vmatprep.subr.bf16.mxu0 0
        %451 = vmatpush1.bf16.msra.mxu0 0
        %452 = vmatprep.subr.bf16.mxu0 0
        %453 = vmatpush1.bf16.msra.mxu0 0
        %454 = vmatprep.subr.bf16.mxu0 %v430
        %455 = vmatpush1.bf16.msra.mxu0 %v429
        %456 = vmatprep.subr.bf16.mxu0 %v427
        %457 = vmatpush1.bf16.msra.mxu0 %v426
        %458 = vmatprep.subr.bf16.mxu0 0
        %459 = vmatpush2.bf16.msra.mxu0 0
        %460 = vmatprep.subr.bf16.mxu0 0
        %461 = vmatpush2.bf16.msra.mxu0 0
        %462 = vmatprep.subr.bf16.mxu0 0
        %463 = vmatpush2.bf16.msra.mxu0 0
        %464 = vmatprep.subr.bf16.mxu0 0
        %465 = vmatpush2.bf16.msra.mxu0 0
        %466 = vmatprep.subr.bf16.mxu0 0
        %467 = vmatpush2.bf16.msra.mxu0 0
        %468 = vmatprep.subr.bf16.mxu0 0
        %469 = vmatpush2.bf16.msra.mxu0 0
        %470 = vmatprep.subr.bf16.mxu0 0
        %471 = vmatpush2.bf16.msra.mxu0 0
        %472 = vmatprep.subr.bf16.mxu0 0
        %473 = vmatpush2.bf16.msra.mxu0 0
        %474 = vmatprep.mubr.bf16.mxu0 0
        %475 = vmatmul.mubr.bf16.gmra.mxu0 %v440
        %v476 = vpop.f32.mrf.mxu0
        %v477 = vadd.f32 0.0, %v476
        %v478 = vpop.f32.mrf.mxu0
        %v479 = vadd.f32 0.0, %v478
        %v480 = vpop.f32.mrf.mxu0
        %v481 = vpop.f32.mrf.mxu0
        %482 = vdwg.mxu0
        %483 = vmatprep.subr.bf16.mxu0 0
        %484 = vmatpush1.bf16.msra.mxu0 0
        %485 = vmatprep.subr.bf16.mxu0 0
        %486 = vmatpush1.bf16.msra.mxu0 0
        %487 = vmatprep.subr.bf16.mxu0 0
        %488 = vmatpush1.bf16.msra.mxu0 0
        %489 = vmatprep.subr.bf16.mxu0 0
        %490 = vmatpush1.bf16.msra.mxu0 0
        %491 = vmatprep.subr.bf16.mxu0 0
        %492 = vmatpush1.bf16.msra.mxu0 0
        %493 = vmatprep.subr.bf16.mxu0 0
        %494 = vmatpush1.bf16.msra.mxu0 0
        %495 = vmatprep.subr.bf16.mxu0 0
        %496 = vmatpush1.bf16.msra.mxu0 %v431
        %497 = vmatprep.subr.bf16.mxu0 0
        %498 = vmatpush1.bf16.msra.mxu0 %v428
        %499 = vmatprep.subr.bf16.mxu0 0
        %500 = vmatpush2.bf16.msra.mxu0 0
        %501 = vmatprep.subr.bf16.mxu0 0
        %502 = vmatpush2.bf16.msra.mxu0 0
        %503 = vmatprep.subr.bf16.mxu0 0
        %504 = vmatpush2.bf16.msra.mxu0 0
        %505 = vmatprep.subr.bf16.mxu0 0
        %506 = vmatpush2.bf16.msra.mxu0 0
        %507 = vmatprep.subr.bf16.mxu0 0
        %508 = vmatpush2.bf16.msra.mxu0 0
        %509 = vmatprep.subr.bf16.mxu0 0
        %510 = vmatpush2.bf16.msra.mxu0 0
        %511 = vmatprep.subr.bf16.mxu0 0
        %512 = vmatpush2.bf16.msra.mxu0 0
        %513 = vmatprep.subr.bf16.mxu0 0
        %514 = vmatpush2.bf16.msra.mxu0 0
        %515 = vmatprep.mubr.bf16.mxu0 0
        %516 = vmatmul.mubr.bf16.gmra.mxu0 %v440
        %v517 = vpop.f32.mrf.mxu0
        %v518 = vadd.f32 0.0, %v517
        %v519 = vpop.f32.mrf.mxu0
        %v520 = vpop.f32.mrf.mxu0
        %v521 = vpop.f32.mrf.mxu0
        %522 = vdwg.mxu0
        %523 = vst [vmem:[%s378] sm:$0xff] %v477
        %524 = vst [vmem:[%s378 + $0x8] sm:$0xff] %v479
        %525 = vst [vmem:[%s378 + $0x10] sm:$0xff] %v518
        %v526 = vld [vmem:[%s370] sm:$0x7]
        %v528 = vlaneseq
        %v529 = vshrl.u32 %v528, 7
        %v530 = vsub.s32 0, %v529
        %v531 = vrot.slane %v526, %v530
        %v532 = vlaneseq
        %v533 = vshrl.u32 %v532, 7
        %v534 = vsub.s32 1, %v533
        %v535 = vrot.slane %v526, %v534
        %v536 = vlaneseq
        %v537 = vshrl.u32 %v536, 7
        %v538 = vsub.s32 2, %v537
        %v539 = vrot.slane %v526, %v538
        %v543 = vadd.f32 %v477, %v531
        %v544 = vadd.f32 %v479, %v535
        %v545 = vadd.f32 %v518, %v539
        %v546 = vld [vmem:[%s363] sm:$0xff]
        %v547 = vld [vmem:[%s363 + $0x8] sm:$0xff]
        %v548 = vld [vmem:[%s363 + $0x10] sm:$0xff]
        %v549 = vld [vmem:[%s1] sm:$0xff]
        %551 = vset.pattern.permute.xlu0 0
        %552 = vperm.xlu0 %551, %v549
        %v553 = vpop.permute.xlu0 %552
        %v555 = vmul.f32 %v546, %v553
        %v556 = vmul.f32 %v547, %v553
        %v557 = vmul.f32 %v548, %v553
        %v558 = vld [vmem:[#allocation2] sm:$0xff]
        %v559 = vmax.f32 %v543, %v544
        %v560 = vmax.f32 %v559, %v545
        %561 = vmax.xlane.f32.xlu0 %v560
        %v562 = vpop.xlane.xlu0 %561
        %v563 = vmax.f32 %v558, %v562
        %v564 = vsub.f32 %v558, %v563
        %v565 = vmul.f32 %v564, 1.442695
        %v566 = vpow.pop %v565
        %568 = vrot.lane.b32.xlu0 %v566, 1
        %v569 = vpop.permute.xlu0 %568
        %v571 = vmul.f32 %v558, %v569
        %573 = vset.pattern.permute.xlu0 0
        %574 = vperm.xlu0 %573, %v563
        %v575 = vpop.permute.xlu0 %574
        %v577 = vsub.f32 %v543, %v575
        %v578 = vsub.f32 %v544, %v575
        %v579 = vsub.f32 %v545, %v575
        %v580 = vmul.f32 %v577, 1.442695
        %v581 = vpow.pop %v580
        %v582 = vmul.f32 %v578, 1.442695
        %v583 = vpow.pop %v582
        %v584 = vmul.f32 %v579, 1.442695
        %v585 = vpow.pop %v584
        %v586 = vadd.f32 %v581, %v583
        %v587 = vadd.f32 %v586, %v585
        %588 = vadd.xlane.f32.xlu0 %v587
        %v589 = vpop.xlane.xlu0 %588
        %v590 = vadd.f32 %v571, %v589
        %vm591 = vcmp.gt.f32.partialorder %v555, 0.0
        %vm592 = vcmp.gt.f32.partialorder %v556, 0.0
        %vm593 = vcmp.gt.f32.partialorder %v557, 0.0
        %v594 = vlog2.pop %v555
        %v595 = vmul.f32 %v594, 0.6931472
        %v596 = vlog2.pop %v556
        %v597 = vmul.f32 %v596, 0.6931472
        %v598 = vlog2.pop %v557
        %v599 = vmul.f32 %v598, 0.6931472
        %v600 = vsub.f32 %v595, %v477
        %v601 = vsub.f32 %v597, %v479
        %v602 = vsub.f32 %v599, %v518
        %v603 = vmul.f32 %v555, %v600
        %v604 = vmul.f32 %v556, %v601
        %v605 = vmul.f32 %v557, %v602
        %v606 = vsel %vm591, %v603, 0.0
        %v607 = vsel %vm592, %v604, 0.0
        %v608 = vsel %vm593, %v605, 0.0
        %v609 = vadd.f32 %v606, %v607
        %v610 = vadd.f32 %v609, %v608
        %611 = vadd.xlane.f32.xlu0 %v610
        %v612 = vpop.xlane.xlu0 %611
        %v613 = vadd.f32 %v558, %v612
        %v614 = vadd.f32 %v555, %v556
        %v615 = vadd.f32 %v614, %v557
        %616 = vadd.xlane.f32.xlu0 %v615
        %v617 = vpop.xlane.xlu0 %616
        %v618 = vadd.f32 %v558, %v617
        %vm619 = vcmask 7168
        %v620 = vsel %vm619, %v563, %v590
        %vm621 = vcmask 15360
        %v622 = vsel %vm621, %v620, %v613
        %vm623 = vcmask 23552
        %v624 = vsel %vm623, %v622, %v618
        %vm625 = vcmask 31744
        %626 = vst.msk [vmem:[#allocation2] sm:$0xff] %vm625, %v624
        // Predicated region
        $region71: #{relation_extractor_forward.3} parent=61 // pred_check
          %p627 = pneg %p386
        $region72: #{relation_extractor_forward.3} parent=61 // pred_check_branch
          %629 = sbr.rel (%p627) target = $region74
        $region73: #{relation_extractor_forward.3} parent=61 // pred_region
          %630 = vst.msk [vmem:[%s384] sm:$0xff] %vm625, %v624
        $region74: #{relation_extractor_forward.3} parent=61 // pred_fallthru
          _
        %s631 = sadd.s32 %s22, %s23
        %s632 = smul.u32 3, %s631
        %p633 = scmp.lt.s32.totalorder %s632, 5
        %s634 = scalar_select %p633, %s632, 5
        %s635 = smul.addr %s634, 8
        %s636 = scalar_lea.vmem %s5, %s635
        %p637 = scmp.lt.s32.totalorder %s22, 1
        %s638 = scalar_select %p637, %s22, 1
        %s639 = smul.addr %s638, 8
        %s640 = scalar_lea.vmem %s6, %s639
        // Predicated region
        $region75: #{relation_extractor_forward.3} parent=61 // pred_check
          %p641 = pneg %p176
        $region76: #{relation_extractor_forward.3} parent=61 // pred_check_branch
          %643 = sbr.rel (%p641) target = $region78
        $region77: #{relation_extractor_forward.3} parent=61 // pred_region
          %s644 = sadd.s32 %s22, %s23
          %s645 = smul.u32 3, %s644
        $region78: #{relation_extractor_forward.3} parent=61 // pred_fallthru
          _
        // Predicated region
        $region79: #{relation_extractor_forward.3} parent=61 // pred_check
          %p646 = pneg %p202
        $region80: #{relation_extractor_forward.3} parent=61 // pred_check_branch
          %648 = sbr.rel (%p646) target = $region82
        $region81: #{relation_extractor_forward.3} parent=61 // pred_region
          _
        $region82: #{relation_extractor_forward.3} parent=61 // pred_fallthru
          _
      $region62: #{relation_extractor_forward.3} parent=5 // pred_fallthru
        _
      %p649 = scmp.le.s32.totalorder 2, %s13
      // Predicated region
      $region83: #{relation_extractor_forward.3} parent=5 // pred_check
        %p650 = pneg %p649
      $region84: #{relation_extractor_forward.3} parent=5 // pred_check_branch
        %652 = sbr.rel (%p650) target = $region86
      $region85: #{relation_extractor_forward.3} parent=5 // pred_region
        %s653 = ssub.s32 %s13, 2
        // Predicated region
        $region87: #{relation_extractor_forward.3} parent=85 // pred_check
          %p654 = pneg %p182
        $region88: #{relation_extractor_forward.3} parent=85 // pred_check_branch
          %656 = sbr.rel (%p654) target = $region90
        $region89: #{relation_extractor_forward.3} parent=85 // pred_region
          %s657 = sadd.s32 %s24, %s25
          %s658 = smul.u32 3, %s657
          %p659 = scmp.lt.s32.totalorder %s658, 5
          %s660 = scalar_select %p659, %s658, 5
          %s661 = smul.addr %s660, 8
          %s662 = scalar_lea.vmem %s5, %s661
        $region90: #{relation_extractor_forward.3} parent=85 // pred_fallthru
          _
        // Predicated region
        $region91: #{relation_extractor_forward.3} parent=85 // pred_check
          %p663 = pneg %p208
        $region92: #{relation_extractor_forward.3} parent=85 // pred_check_branch
          %665 = sbr.rel (%p663) target = $region94
        $region93: #{relation_extractor_forward.3} parent=85 // pred_region
          %p666 = scmp.lt.s32.totalorder %s24, 1
          %s667 = scalar_select %p666, %s24, 1
          %s668 = smul.addr %s667, 8
          %s669 = scalar_lea.vmem %s6, %s668
        $region94: #{relation_extractor_forward.3} parent=85 // pred_fallthru
          _
      $region86: #{relation_extractor_forward.3} parent=5 // pred_fallthru
        _
    $region6: #{relation_extractor_forward.3} parent=1 // loop_footer
      %s17 = sadd.s32 1, %s13
    $region7: #{relation_extractor_forward.3} parent=1 // loop_footer_branch
      %12 = sbr.rel target = $region3
    $region8: #{relation_extractor_forward.3} parent=1 // loop_exit
      _

// kernel: relation_extractor_forward.2
$region0: #{relation_extractor_forward.2}
  #allocation0 [shape = 'u32[]', space=smem, size = 0x4, offset = 0x4, fixed_abs, tag = 'smem constant byte address 0x4 - core index']
  #allocation1 [shape = 'u32[144,128]{1,0:T(1,128)}', space=vmem, size = 0x12000, scoped, tag = 'internal scratch']
  %s0 = inlined_call_operand.vmem [shape: f32[8,32], index: 0, kind: input, shape index: {}]
  %s1 = inlined_call_operand.vmem [shape: f32[32,32], index: 1, kind: input, shape index: {}]
  %s2 = inlined_call_operand.vmem [shape: f32[1,32], index: 2, kind: input, shape index: {}]
  %s3 = inlined_call_operand.vmem [shape: f32[8,32], index: 3, kind: input, shape index: {}]
  %s4 = inlined_call_operand.vmem [shape: f32[32,32], index: 4, kind: input, shape index: {}]
  %s5 = inlined_call_operand.vmem [shape: f32[1,32], index: 5, kind: input, shape index: {}]
  %s6 = inlined_call_operand.vmem [shape: f32[8,32], index: 6, kind: input, shape index: {}]
  %s7 = inlined_call_operand.vmem [shape: f32[32,32], index: 7, kind: input, shape index: {}]
  %s8 = inlined_call_operand.vmem [shape: f32[1,32], index: 8, kind: input, shape index: {}]
  %s9 = inlined_call_operand.vmem [shape: f32[8], index: 9, kind: input, shape index: {}]
  %s10 = inlined_call_operand.vmem [shape: f32[8,1], index: 10, kind: input, shape index: {}]
  %s11 = inlined_call_operand.vmem [shape: f32[8,32], index: 11, kind: output, shape index: {}]
  %s12 = sld [smem:[#allocation0]]
  $region58: #{relation_extractor_forward.2} parent=0
    _
  %s14 = ssub.s32 1, %s12
  %s15 = scalar_select 0, %s14, %s12
  $region1: #{relation_extractor_forward.2} parent=0
    #allocation2 [shape = 'u8[512]{0}', space=smem, size = 0x200, scoped, tag = 'input window, operand 9, single buffered']
    #allocation3 [shape = 's32[1]{0}', space=sflag, size = 0x4, scoped, tag = 'scoped memory for relation_extractor_forward.2']
    %16 = vsyncpa [#allocation3], 0
    // Predicated region
    $region2: #{relation_extractor_forward.2} parent=1 // pred_check
      _
    $region3: #{relation_extractor_forward.2} parent=1 // pred_check_branch
      %18 = sbr.rel (0) target = $region5
    $region4: #{relation_extractor_forward.2} parent=1 // pred_region
      _
    $region5: #{relation_extractor_forward.2} parent=1 // pred_fallthru
      _
    // Predicated region
    $region6: #{relation_extractor_forward.2} parent=1 // pred_check
      _
    $region7: #{relation_extractor_forward.2} parent=1 // pred_check_branch
      %20 = sbr.rel (0) target = $region9
    $region8: #{relation_extractor_forward.2} parent=1 // pred_region
      _
    $region9: #{relation_extractor_forward.2} parent=1 // pred_fallthru
      _
    // Predicated region
    $region10: #{relation_extractor_forward.2} parent=1 // pred_check
      _
    $region11: #{relation_extractor_forward.2} parent=1 // pred_check_branch
      %22 = sbr.rel (0) target = $region13
    $region12: #{relation_extractor_forward.2} parent=1 // pred_region
      _
    $region13: #{relation_extractor_forward.2} parent=1 // pred_fallthru
      _
    // Predicated region
    $region14: #{relation_extractor_forward.2} parent=1 // pred_check
      _
    $region15: #{relation_extractor_forward.2} parent=1 // pred_check_branch
      %24 = sbr.rel (0) target = $region17
    $region16: #{relation_extractor_forward.2} parent=1 // pred_region
      _
    $region17: #{relation_extractor_forward.2} parent=1 // pred_fallthru
      _
    // Predicated region
    $region18: #{relation_extractor_forward.2} parent=1 // pred_check
      _
    $region19: #{relation_extractor_forward.2} parent=1 // pred_check_branch
      %26 = sbr.rel (0) target = $region21
    $region20: #{relation_extractor_forward.2} parent=1 // pred_region
      _
    $region21: #{relation_extractor_forward.2} parent=1 // pred_fallthru
      _
    // Predicated region
    $region22: #{relation_extractor_forward.2} parent=1 // pred_check
      _
    $region23: #{relation_extractor_forward.2} parent=1 // pred_check_branch
      %28 = sbr.rel (0) target = $region25
    $region24: #{relation_extractor_forward.2} parent=1 // pred_region
      _
    $region25: #{relation_extractor_forward.2} parent=1 // pred_fallthru
      _
    // Predicated region
    $region26: #{relation_extractor_forward.2} parent=1 // pred_check
      _
    $region27: #{relation_extractor_forward.2} parent=1 // pred_check_branch
      %30 = sbr.rel (0) target = $region29
    $region28: #{relation_extractor_forward.2} parent=1 // pred_region
      _
    $region29: #{relation_extractor_forward.2} parent=1 // pred_fallthru
      _
    // Predicated region
    $region30: #{relation_extractor_forward.2} parent=1 // pred_check
      _
    $region31: #{relation_extractor_forward.2} parent=1 // pred_check_branch
      %32 = sbr.rel (0) target = $region33
    $region32: #{relation_extractor_forward.2} parent=1 // pred_region
      _
    $region33: #{relation_extractor_forward.2} parent=1 // pred_fallthru
      _
    // Predicated region
    $region34: #{relation_extractor_forward.2} parent=1 // pred_check
      _
    $region35: #{relation_extractor_forward.2} parent=1 // pred_check_branch
      %34 = sbr.rel (0) target = $region37
    $region36: #{relation_extractor_forward.2} parent=1 // pred_region
      _
    $region37: #{relation_extractor_forward.2} parent=1 // pred_fallthru
      _
    // Predicated region
    $region38: #{relation_extractor_forward.2} parent=1 // pred_check
      _
    $region39: #{relation_extractor_forward.2} parent=1 // pred_check_branch
      %36 = sbr.rel (0) target = $region41
    $region40: #{relation_extractor_forward.2} parent=1 // pred_region
      %s38 = ssub.s32 16, 16
      %39 = vsyncadd [#allocation3], %s38
      %s41 = sshll.u32 %s9, 4
      %s42 = int_to_ptr.vmem [resolvable:$true] %s41
      %44 = dma.vmem_to_smem %s42, 16, [#allocation2], [#allocation3]
    $region41: #{relation_extractor_forward.2} parent=1 // pred_fallthru
      _
    // Predicated region
    $region42: #{relation_extractor_forward.2} parent=1 // pred_check
      _
    $region43: #{relation_extractor_forward.2} parent=1 // pred_check_branch
      %46 = sbr.rel (0) target = $region45
    $region44: #{relation_extractor_forward.2} parent=1 // pred_region
      _
    $region45: #{relation_extractor_forward.2} parent=1 // pred_fallthru
      _
    // Predicated region
    $region46: #{relation_extractor_forward.2} parent=1 // pred_check
      _
    $region47: #{relation_extractor_forward.2} parent=1 // pred_check_branch
      %48 = sbr.rel (0) target = $region49
    $region48: #{relation_extractor_forward.2} parent=1 // pred_region
      %49 = dma.done [#allocation3], 16
    $region49: #{relation_extractor_forward.2} parent=1 // pred_fallthru
      _
    %50 = sfence
    %v51 = vld [vmem:[%s10] sm:$0xff]
    %v52 = vld [vmem:[%s0] sm:$0xff]
    %v53 = vld [vmem:[%s1] sm:$0xff]
    %v54 = vld [vmem:[%s1 + $0x8] sm:$0xff]
    %v55 = vld [vmem:[%s1 + $0x10] sm:$0xff]
    %v56 = vld [vmem:[%s1 + $0x18] sm:$0xff]
    %v57 = vld [vmem:[%s2] sm:$0x1]
    %v59 = vlaneseq
    %v60 = vshrl.u32 %v59, 7
    %v61 = vsub.s32 0, %v60
    %v62 = vrot.slane %v57, %v61
    %vm64 = vcmask 261120
    %v66 = vsel %vm64, %v52, 0
    %68 = vmatprep.subr.mxu0 0.0
    %69 = vmatpush1.msra.mxu0 0.0
    %70 = vmatprep.subr.mxu0 0.0
    %71 = vmatpush1.msra.mxu0 0.0
    %72 = vmatprep.subr.mxu0 0.0
    %73 = vmatpush1.msra.mxu0 0.0
    %74 = vmatprep.subr.mxu0 0.0
    %75 = vmatpush1.msra.mxu0 0.0
    %76 = vmatprep.subr.mxu0 0.0
    %77 = vmatpush1.msra.mxu0 0.0
    %78 = vmatprep.subr.mxu0 0.0
    %79 = vmatpush1.msra.mxu0 0.0
    %80 = vmatprep.subr.mxu0 0.0
    %81 = vmatpush1.msra.mxu0 0.0
    %82 = vmatprep.subr.mxu0 0.0
    %83 = vmatpush1.msra.mxu0 0.0
    %84 = vmatprep.subr.mxu0 0.0
    %85 = vmatpush1.msra.mxu0 0.0
    %86 = vmatprep.subr.mxu0 0.0
    %87 = vmatpush1.msra.mxu0 0.0
    %88 = vmatprep.subr.mxu0 0.0
    %89 = vmatpush1.msra.mxu0 0.0
    %90 = vmatprep.subr.mxu0 0.0
    %91 = vmatpush1.msra.mxu0 0.0
    %92 = vmatprep.subr.mxu0 0.0
    %93 = vmatpush1.msra.mxu0 %v56
    %94 = vmatprep.subr.mxu0 0.0
    %95 = vmatpush1.msra.mxu0 %v55
    %96 = vmatprep.subr.mxu0 0.0
    %97 = vmatpush1.msra.mxu0 %v54
    %98 = vmatprep.subr.mxu0 0.0
    %99 = vmatpush1.msra.mxu0 %v53
    %100 = vmatprep.subr.mxu0 0.0
    %101 = vmatpush2.msra.mxu0 0.0
    %102 = vmatprep.subr.mxu0 0.0
    %103 = vmatpush2.msra.mxu0 0.0
    %104 = vmatprep.subr.mxu0 0.0
    %105 = vmatpush2.msra.mxu0 0.0
    %106 = vmatprep.subr.mxu0 0.0
    %107 = vmatpush2.msra.mxu0 0.0
    %108 = vmatprep.subr.mxu0 0.0
    %109 = vmatpush2.msra.mxu0 0.0
    %110 = vmatprep.subr.mxu0 0.0
    %111 = vmatpush2.msra.mxu0 0.0
    %112 = vmatprep.subr.mxu0 0.0
    %113 = vmatpush2.msra.mxu0 0.0
    %114 = vmatprep.subr.mxu0 0.0
    %115 = vmatpush2.msra.mxu0 0.0
    %116 = vmatprep.subr.mxu0 0.0
    %117 = vmatpush2.msra.mxu0 0.0
    %118 = vmatprep.subr.mxu0 0.0
    %119 = vmatpush2.msra.mxu0 0.0
    %120 = vmatprep.subr.mxu0 0.0
    %121 = vmatpush2.msra.mxu0 0.0
    %122 = vmatprep.subr.mxu0 0.0
    %123 = vmatpush2.msra.mxu0 0.0
    %124 = vmatprep.subr.mxu0 0.0
    %125 = vmatpush2.msra.mxu0 0.0
    %126 = vmatprep.subr.mxu0 0.0
    %127 = vmatpush2.msra.mxu0 0.0
    %128 = vmatprep.subr.mxu0 0.0
    %129 = vmatpush2.msra.mxu0 0.0
    %130 = vmatprep.subr.mxu0 0.0
    %131 = vmatpush2.msra.mxu0 0.0
    %132 = vmatprep.mubr.f32.mxu0 0.0
    %133 = vmatmul.mubr.f32.gmra.mxu0 %v66
    %v134 = vpop.f32.mrf.mxu0
    %v135 = vadd.f32 %v62, %v134
    %v136 = vpop.f32.mrf.mxu0
    %137 = vdwg.mxu0
    %v138 = vld [vmem:[%s3] sm:$0xff]
    %v139 = vld [vmem:[%s4] sm:$0xff]
    %v140 = vld [vmem:[%s4 + $0x8] sm:$0xff]
    %v141 = vld [vmem:[%s4 + $0x10] sm:$0xff]
    %v142 = vld [vmem:[%s4 + $0x18] sm:$0xff]
    %v143 = vld [vmem:[%s5] sm:$0x1]
    %v145 = vlaneseq
    %v146 = vshrl.u32 %v145, 7
    %v147 = vsub.s32 0, %v146
    %v148 = vrot.slane %v143, %v147
    %v151 = vsel %vm64, %v138, 0
    %153 = vmatprep.subr.mxu0 0.0
    %154 = vmatpush1.msra.mxu0 0.0
    %155 = vmatprep.subr.mxu0 0.0
    %156 = vmatpush1.msra.mxu0 0.0
    %157 = vmatprep.subr.mxu0 0.0
    %158 = vmatpush1.msra.mxu0 0.0
    %159 = vmatprep.subr.mxu0 0.0
    %160 = vmatpush1.msra.mxu0 0.0
    %161 = vmatprep.subr.mxu0 0.0
    %162 = vmatpush1.msra.mxu0 0.0
    %163 = vmatprep.subr.mxu0 0.0
    %164 = vmatpush1.msra.mxu0 0.0
    %165 = vmatprep.subr.mxu0 0.0
    %166 = vmatpush1.msra.mxu0 0.0
    %167 = vmatprep.subr.mxu0 0.0
    %168 = vmatpush1.msra.mxu0 0.0
    %169 = vmatprep.subr.mxu0 0.0
    %170 = vmatpush1.msra.mxu0 0.0
    %171 = vmatprep.subr.mxu0 0.0
    %172 = vmatpush1.msra.mxu0 0.0
    %173 = vmatprep.subr.mxu0 0.0
    %174 = vmatpush1.msra.mxu0 0.0
    %175 = vmatprep.subr.mxu0 0.0
    %176 = vmatpush1.msra.mxu0 0.0
    %177 = vmatprep.subr.mxu0 0.0
    %178 = vmatpush1.msra.mxu0 %v142
    %179 = vmatprep.subr.mxu0 0.0
    %180 = vmatpush1.msra.mxu0 %v141
    %181 = vmatprep.subr.mxu0 0.0
    %182 = vmatpush1.msra.mxu0 %v140
    %183 = vmatprep.subr.mxu0 0.0
    %184 = vmatpush1.msra.mxu0 %v139
    %185 = vmatprep.subr.mxu0 0.0
    %186 = vmatpush2.msra.mxu0 0.0
    %187 = vmatprep.subr.mxu0 0.0
    %188 = vmatpush2.msra.mxu0 0.0
    %189 = vmatprep.subr.mxu0 0.0
    %190 = vmatpush2.msra.mxu0 0.0
    %191 = vmatprep.subr.mxu0 0.0
    %192 = vmatpush2.msra.mxu0 0.0
    %193 = vmatprep.subr.mxu0 0.0
    %194 = vmatpush2.msra.mxu0 0.0
    %195 = vmatprep.subr.mxu0 0.0
    %196 = vmatpush2.msra.mxu0 0.0
    %197 = vmatprep.subr.mxu0 0.0
    %198 = vmatpush2.msra.mxu0 0.0
    %199 = vmatprep.subr.mxu0 0.0
    %200 = vmatpush2.msra.mxu0 0.0
    %201 = vmatprep.subr.mxu0 0.0
    %202 = vmatpush2.msra.mxu0 0.0
    %203 = vmatprep.subr.mxu0 0.0
    %204 = vmatpush2.msra.mxu0 0.0
    %205 = vmatprep.subr.mxu0 0.0
    %206 = vmatpush2.msra.mxu0 0.0
    %207 = vmatprep.subr.mxu0 0.0
    %208 = vmatpush2.msra.mxu0 0.0
    %209 = vmatprep.subr.mxu0 0.0
    %210 = vmatpush2.msra.mxu0 0.0
    %211 = vmatprep.subr.mxu0 0.0
    %212 = vmatpush2.msra.mxu0 0.0
    %213 = vmatprep.subr.mxu0 0.0
    %214 = vmatpush2.msra.mxu0 0.0
    %215 = vmatprep.subr.mxu0 0.0
    %216 = vmatpush2.msra.mxu0 0.0
    %217 = vmatprep.mubr.f32.mxu0 0.0
    %218 = vmatmul.mubr.f32.gmra.mxu0 %v151
    %v219 = vpop.f32.mrf.mxu0
    %v220 = vadd.f32 %v148, %v219
    %v221 = vpop.f32.mrf.mxu0
    %222 = vdwg.mxu0
    %v223 = vld [vmem:[%s6] sm:$0xff]
    %v224 = vld [vmem:[%s7] sm:$0xff]
    %v225 = vld [vmem:[%s7 + $0x8] sm:$0xff]
    %v226 = vld [vmem:[%s7 + $0x10] sm:$0xff]
    %v227 = vld [vmem:[%s7 + $0x18] sm:$0xff]
    %v229 = vsel %vm64, %v223, 0
    %231 = vmatprep.subr.mxu0 0.0
    %232 = vmatpush1.msra.mxu0 0.0
    %233 = vmatprep.subr.mxu0 0.0
    %234 = vmatpush1.msra.mxu0 0.0
    %235 = vmatprep.subr.mxu0 0.0
    %236 = vmatpush1.msra.mxu0 0.0
    %237 = vmatprep.subr.mxu0 0.0
    %238 = vmatpush1.msra.mxu0 0.0
    %239 = vmatprep.subr.mxu0 0.0
    %240 = vmatpush1.msra.mxu0 0.0
    %241 = vmatprep.subr.mxu0 0.0
    %242 = vmatpush1.msra.mxu0 0.0
    %243 = vmatprep.subr.mxu0 0.0
    %244 = vmatpush1.msra.mxu0 0.0
    %245 = vmatprep.subr.mxu0 0.0
    %246 = vmatpush1.msra.mxu0 0.0
    %247 = vmatprep.subr.mxu0 0.0
    %248 = vmatpush1.msra.mxu0 0.0
    %249 = vmatprep.subr.mxu0 0.0
    %250 = vmatpush1.msra.mxu0 0.0
    %251 = vmatprep.subr.mxu0 0.0
    %252 = vmatpush1.msra.mxu0 0.0
    %253 = vmatprep.subr.mxu0 0.0
    %254 = vmatpush1.msra.mxu0 0.0
    %255 = vmatprep.subr.mxu0 0.0
    %256 = vmatpush1.msra.mxu0 %v227
    %257 = vmatprep.subr.mxu0 0.0
    %258 = vmatpush1.msra.mxu0 %v226
    %259 = vmatprep.subr.mxu0 0.0
    %260 = vmatpush1.msra.mxu0 %v225
    %261 = vmatprep.subr.mxu0 0.0
    %262 = vmatpush1.msra.mxu0 %v224
    %263 = vmatprep.subr.mxu0 0.0
    %264 = vmatpush2.msra.mxu0 0.0
    %265 = vmatprep.subr.mxu0 0.0
    %266 = vmatpush2.msra.mxu0 0.0
    %267 = vmatprep.subr.mxu0 0.0
    %268 = vmatpush2.msra.mxu0 0.0
    %269 = vmatprep.subr.mxu0 0.0
    %270 = vmatpush2.msra.mxu0 0.0
    %271 = vmatprep.subr.mxu0 0.0
    %272 = vmatpush2.msra.mxu0 0.0
    %273 = vmatprep.subr.mxu0 0.0
    %274 = vmatpush2.msra.mxu0 0.0
    %275 = vmatprep.subr.mxu0 0.0
    %276 = vmatpush2.msra.mxu0 0.0
    %277 = vmatprep.subr.mxu0 0.0
    %278 = vmatpush2.msra.mxu0 0.0
    %279 = vmatprep.subr.mxu0 0.0
    %280 = vmatpush2.msra.mxu0 0.0
    %281 = vmatprep.subr.mxu0 0.0
    %282 = vmatpush2.msra.mxu0 0.0
    %283 = vmatprep.subr.mxu0 0.0
    %284 = vmatpush2.msra.mxu0 0.0
    %285 = vmatprep.subr.mxu0 0.0
    %286 = vmatpush2.msra.mxu0 0.0
    %287 = vmatprep.subr.mxu0 0.0
    %288 = vmatpush2.msra.mxu0 0.0
    %289 = vmatprep.subr.mxu0 0.0
    %290 = vmatpush2.msra.mxu0 0.0
    %291 = vmatprep.subr.mxu0 0.0
    %292 = vmatpush2.msra.mxu0 0.0
    %293 = vmatprep.subr.mxu0 0.0
    %294 = vmatpush2.msra.mxu0 0.0
    %295 = vmatprep.mubr.f32.mxu0 0.0
    %296 = vmatmul.mubr.f32.gmra.mxu0 %v229
    %v297 = vpop.f32.mrf.mxu0
    %v298 = vadd.f32 0.0, %v297
    %v299 = vpop.f32.mrf.mxu0
    %300 = vdwg.mxu0
    %v301 = vadd.f32 %v220, %v298
    %v302 = vld [vmem:[%s8] sm:$0x1]
    %v304 = vlaneseq
    %v305 = vshrl.u32 %v304, 7
    %v306 = vsub.s32 0, %v305
    %v307 = vrot.slane %v302, %v306
    %v309 = vadd.f32 %v301, %v307
    %s310 = sld [smem:[#allocation2]]
    %s311 = sld [smem:[#allocation2 + $0x2]]
    %313 = vset.pattern.permute.xlu0 0
    %314 = vperm.xlu0 %313, %v51
    %v315 = vpop.permute.xlu0 %314
    %v317 = vmul.f32 %v309, %v315
    %vm318 = vcmask 130048
    %v319 = vsel %vm318, %v317, 0.0
    %320 = vadd.xlane.f32.xlu0 %v319
    %v321 = vpop.xlane.xlu0 %320
    %v322 = vrot.slane %v321, 4
    %v323 = vadd.f32 %v321, %v322
    %v324 = vrot.slane %v323, 2
    %v325 = vadd.f32 %v323, %v324
    %v326 = vrot.slane %v325, 1
    %v327 = vadd.f32 %v325, %v326
    %s328 = vtos %v327
    %s329 = smul.f32 %s328, 0.03125
    %v330 = vstv %s329
    %v331 = vsub.f32 %v309, %v330
    %v332 = vmul.f32 %v331, %v315
    %v333 = vmul.f32 %v332, %v332
    %v334 = vsel %vm318, %v333, 0.0
    %335 = vadd.xlane.f32.xlu0 %v334
    %v336 = vpop.xlane.xlu0 %335
    %v337 = vrot.slane %v336, 4
    %v338 = vadd.f32 %v336, %v337
    %v339 = vrot.slane %v338, 2
    %v340 = vadd.f32 %v338, %v339
    %v341 = vrot.slane %v340, 1
    %v342 = vadd.f32 %v340, %v341
    %s343 = vtos %v342
    %s344 = smul.f32 %s343, 0.03125
    %s345 = sadd.f32 %s344, 1e-05
    %v346 = vstv %s345
    %v347 = vrsqrt.pop %v346
    %s348 = vtos %v347
    %v349 = vstv %s348
    %v350 = vmul.f32 %v331, %v349
    %v351 = vstv %s310
    %v352 = vmul.f32 %v350, %v351
    %v353 = vstv %s311
    %v354 = vadd.f32 %v352, %v353
    %s355 = sld [smem:[#allocation2 + $0x1]]
    %s356 = sld [smem:[#allocation2 + $0x3]]
    %358 = vrot.lane.b32.xlu0 %v317, 112
    %v359 = vpop.permute.xlu0 %358
    %v361 = vsel %vm318, %v359, 0.0
    %362 = vadd.xlane.f32.xlu0 %v361
    %v363 = vpop.xlane.xlu0 %362
    %v364 = vrot.slane %v363, 4
    %v365 = vadd.f32 %v363, %v364
    %v366 = vrot.slane %v365, 2
    %v367 = vadd.f32 %v365, %v366
    %v368 = vrot.slane %v367, 1
    %v369 = vadd.f32 %v367, %v368
    %s370 = vtos %v369
    %s371 = smul.f32 %s370, 0.03125
    %v372 = vstv %s371
    %v373 = vsub.f32 %v309, %v372
    %v374 = vmul.f32 %v373, %v315
    %v375 = vmul.f32 %v374, %v374
    %377 = vrot.lane.b32.xlu0 %v375, 112
    %v378 = vpop.permute.xlu0 %377
    %v380 = vsel %vm318, %v378, 0.0
    %381 = vadd.xlane.f32.xlu0 %v380
    %v382 = vpop.xlane.xlu0 %381
    %v383 = vrot.slane %v382, 4
    %v384 = vadd.f32 %v382, %v383
    %v385 = vrot.slane %v384, 2
    %v386 = vadd.f32 %v384, %v385
    %v387 = vrot.slane %v386, 1
    %v388 = vadd.f32 %v386, %v387
    %s389 = vtos %v388
    %s390 = smul.f32 %s389, 0.03125
    %s391 = sadd.f32 %s390, 1e-05
    %v392 = vstv %s391
    %v393 = vrsqrt.pop %v392
    %s394 = vtos %v393
    %v395 = vstv %s394
    %v396 = vmul.f32 %v373, %v395
    %v397 = vstv %s355
    %v398 = vmul.f32 %v396, %v397
    %v399 = vstv %s356
    %v400 = vadd.f32 %v398, %v399
    %v401 = vmul.f32 %v354, %v135
    %v402 = vmul.f32 %v400, %v135
    %404 = vrot.lane.b32.xlu0 %v402, 112
    %v405 = vpop.permute.xlu0 %404
    %v407 = vsub.f32 %v401, %v405
    %409 = vrot.lane.b32.xlu0 %v135, 112
    %v410 = vpop.permute.xlu0 %409
    %v412 = vmul.f32 %v354, %v410
    %413 = vrot.lane.b32.xlu0 %v135, 16
    %v414 = vpop.permute.xlu0 %413
    %v416 = vmul.f32 %v400, %v414
    %418 = vrot.lane.b32.xlu0 %v416, 112
    %v419 = vpop.permute.xlu0 %418
    %v421 = vadd.f32 %v412, %v419
    %s422 = sld [smem:[#allocation2 + $0x4]]
    %s423 = sld [smem:[#allocation2 + $0x6]]
    %v424 = vmul.f32 %v407, %v315
    %v425 = vsel %vm318, %v424, 0.0
    %426 = vadd.xlane.f32.xlu0 %v425
    %v427 = vpop.xlane.xlu0 %426
    %v428 = vrot.slane %v427, 4
    %v429 = vadd.f32 %v427, %v428
    %v430 = vrot.slane %v429, 2
    %v431 = vadd.f32 %v429, %v430
    %v432 = vrot.slane %v431, 1
    %v433 = vadd.f32 %v431, %v432
    %s434 = vtos %v433
    %s435 = smul.f32 %s434, 0.03125
    %v436 = vstv %s435
    %v437 = vsub.f32 %v407, %v436
    %v438 = vmul.f32 %v437, %v315
    %v439 = vmul.f32 %v438, %v438
    %v440 = vsel %vm318, %v439, 0.0
    %441 = vadd.xlane.f32.xlu0 %v440
    %v442 = vpop.xlane.xlu0 %441
    %v443 = vrot.slane %v442, 4
    %v444 = vadd.f32 %v442, %v443
    %v445 = vrot.slane %v444, 2
    %v446 = vadd.f32 %v444, %v445
    %v447 = vrot.slane %v446, 1
    %v448 = vadd.f32 %v446, %v447
    %s449 = vtos %v448
    %s450 = smul.f32 %s449, 0.03125
    %s451 = sadd.f32 %s450, 1e-05
    %v452 = vstv %s451
    %v453 = vrsqrt.pop %v452
    %s454 = vtos %v453
    %v455 = vstv %s454
    %v456 = vmul.f32 %v437, %v455
    %v457 = vstv %s422
    %v458 = vmul.f32 %v456, %v457
    %v459 = vstv %s423
    %v460 = vadd.f32 %v458, %v459
    %v461 = vmul.f32 %v460, %v315
    %462 = vst.msk [vmem:[%s11] sm:$0xff] %vm318, %v461
    %s463 = sld [smem:[#allocation2 + $0x5]]
    %s464 = sld [smem:[#allocation2 + $0x7]]
    %v465 = vmul.f32 %v421, %v315
    %v466 = vsel %vm318, %v465, 0.0
    %467 = vadd.xlane.f32.xlu0 %v466
    %v468 = vpop.xlane.xlu0 %467
    %v469 = vrot.slane %v468, 4
    %v470 = vadd.f32 %v468, %v469
    %v471 = vrot.slane %v470, 2
    %v472 = vadd.f32 %v470, %v471
    %v473 = vrot.slane %v472, 1
    %v474 = vadd.f32 %v472, %v473
    %s475 = vtos %v474
    %s476 = smul.f32 %s475, 0.03125
    %v477 = vstv %s476
    %v478 = vsub.f32 %v421, %v477
    %v479 = vmul.f32 %v478, %v315
    %v480 = vmul.f32 %v479, %v479
    %v481 = vsel %vm318, %v480, 0.0
    %482 = vadd.xlane.f32.xlu0 %v481
    %v483 = vpop.xlane.xlu0 %482
    %v484 = vrot.slane %v483, 4
    %v485 = vadd.f32 %v483, %v484
    %v486 = vrot.slane %v485, 2
    %v487 = vadd.f32 %v485, %v486
    %v488 = vrot.slane %v487, 1
    %v489 = vadd.f32 %v487, %v488
    %s490 = vtos %v489
    %s491 = smul.f32 %s490, 0.03125
    %s492 = sadd.f32 %s491, 1e-05
    %v493 = vstv %s492
    %v494 = vrsqrt.pop %v493
    %s495 = vtos %v494
    %v496 = vstv %s495
    %v497 = vmul.f32 %v478, %v496
    %v498 = vstv %s463
    %v499 = vmul.f32 %v497, %v498
    %v500 = vstv %s464
    %v501 = vadd.f32 %v499, %v500
    %v502 = vmul.f32 %v501, %v315
    %504 = vrot.lane.b32.xlu0 %v502, 16
    %v505 = vpop.permute.xlu0 %504
    %vm507 = vcmask 261248
    %508 = vst.msk [vmem:[%s11] sm:$0xff] %vm507, %v505
    // Predicated region
    $region50: #{relation_extractor_forward.2} parent=1 // pred_check
      _
    $region51: #{relation_extractor_forward.2} parent=1 // pred_check_branch
      %510 = sbr.rel (0) target = $region53
    $region52: #{relation_extractor_forward.2} parent=1 // pred_region
      _
    $region53: #{relation_extractor_forward.2} parent=1 // pred_fallthru
      _
    // Predicated region
    $region54: #{relation_extractor_forward.2} parent=1 // pred_check
      _
    $region55: #{relation_extractor_forward.2} parent=1 // pred_check_branch
      %512 = sbr.rel (0) target = $region57
    $region56: #{relation_extractor_forward.2} parent=1 // pred_region
      _
    $region57: #{relation_extractor_forward.2} parent=1 // pred_fallthru
      _
    %513 = vsyncpa [#allocation3], 1

</llo_original>
